<compile_context>
chip_gen: v5e
topology: v5e:2x2
jax: 0.10.0
libtpu: 0.0.40
codegen_flags: <defaults>
</compile_context>

<pallas_src>
import math

import jax
import jax.numpy as jnp
from jax.experimental import pallas as pl
from jax.experimental.pallas import tpu as pltpu


def lstm_head_kernel(x_ref, wih_t_ref, whh_t_ref, b_ref, wout_ref, bout_ref,
                     out_ref):
    """Whole-sequence LSTM recurrence + final Linear(H, 1), fully in VMEM.

    x_ref     : [B, T, I]   batch-first input sequence
    wih_t_ref : [I, 4H]     input->gates weights (transposed)
    whh_t_ref : [H, 4H]     hidden->gates weights (transposed)
    b_ref     : [1, 4H]     b_ih + b_hh
    wout_ref  : [1, H]      output projection row (== nn.Linear(H,1).weight)
    bout_ref  : [1, 1]      output bias
    out_ref   : [B, 1]      model output
    """
    B, T, I = x_ref.shape
    H = whh_t_ref.shape[0]

    whh_t = whh_t_ref[...]

    # --- Hoisted input projection + bias (off the serial dependency chain) ---
    # (B*T, I) @ (I, 4H) + (1, 4H)  ->  (B*T, 4H), done once.
    x_flat = x_ref[...].reshape(B * T, I)
    xp = (jnp.dot(x_flat, wih_t_ref[...], preferred_element_type=jnp.float32)
          + b_ref[...])
    xp = xp.reshape(B, T, 4 * H)

    h = jnp.zeros((B, H), jnp.float32)
    c = jnp.zeros((B, H), jnp.float32)

    # --- Recurrence: fully unrolled (T is small & static) ---
    # Per step: one MXU matmul + full-width sigmoid/tanh + VPU updates.
    # PyTorch gate order: i, f, g, o.
    for t in range(T):
        gates = xp[:, t, :] + jnp.dot(h, whh_t,
                                      preferred_element_type=jnp.float32)
        sig = jax.nn.sigmoid(gates)   # full (B, 4H) vreg
        tnh = jnp.tanh(gates)         # full (B, 4H) vreg
        i_g = sig[:, 0 * H:1 * H]
        f_g = sig[:, 1 * H:2 * H]
        g_g = tnh[:, 2 * H:3 * H]
        o_g = sig[:, 3 * H:4 * H]
        c = f_g * c + i_g * g_g
        h = o_g * jnp.tanh(c)

    # --- output_layer(output[:, -1, :]) == h_T @ W_out^T + b_out ---
    # Multiply + lane-reduce (VPU/XLU) instead of a 1-lane MXU matmul.
    out_ref[...] = (jnp.sum(h * wout_ref[...], axis=-1, keepdims=True)
                    + bout_ref[...])


def prepare_params(w_ih, w_hh, b_ih, b_hh, w_out, b_out):
    """One-time parameter preprocessing (kept out of the per-call hot path)."""
    H = w_hh.shape[1]
    return (
        jnp.asarray(w_ih.T, jnp.float32),                    # [I, 4H]
        jnp.asarray(w_hh.T, jnp.float32),                    # [H, 4H]
        (b_ih + b_hh).reshape(1, 4 * H).astype(jnp.float32), # [1, 4H]
        jnp.asarray(w_out.reshape(1, H), jnp.float32),       # [1, H]
        jnp.asarray(b_out.reshape(1, 1), jnp.float32),       # [1, 1]
    )


@jax.jit
def model_forward(x_bti, wih_t, whh_t, b, wout, bout):
    """x_bti: [B, T, I] float32 (batch-first, like PyTorch batch_first=True)."""
    B = x_bti.shape[0]
    vmem = pl.BlockSpec(memory_space=pltpu.MemorySpace.VMEM)
    return pl.pallas_call(
        lstm_head_kernel,
        out_shape=jax.ShapeDtypeStruct((B, 1), jnp.float32),
        in_specs=[vmem] * 6,
        out_specs=vmem,
    )(x_bti, wih_t, whh_t, b, wout, bout)


def reference_forward(x_bti, w_ih, w_hh, b_ih, b_hh, w_out, b_out):
    """Pure-JAX reference (mirrors torch.nn.LSTM + Linear)."""
    B, T, I = x_bti.shape
    H = w_hh.shape[1]
    h = jnp.zeros((B, H), jnp.float32)
    c = jnp.zeros((B, H), jnp.float32)
    for t in range(T):
        gates = x_bti[:, t, :] @ w_ih.T + h @ w_hh.T + b_ih + b_hh
        i_g = jax.nn.sigmoid(gates[:, 0 * H:1 * H])
        f_g = jax.nn.sigmoid(gates[:, 1 * H:2 * H])
        g_g = jnp.tanh(gates[:, 2 * H:3 * H])
        o_g = jax.nn.sigmoid(gates[:, 3 * H:4 * H])
        c = f_g * c + i_g * g_g
        h = o_g * jnp.tanh(c)
    return h @ w_out.T + b_out


if __name__ == "__main__":
    # Adding-task-like shapes: 2 input features per step.
    B, T, I, H = 8, 8, 2, 32

    key = jax.random.PRNGKey(0)
    kx, k1, k2, k3, k4, k5, k6 = jax.random.split(key, 7)
    bound = 1.0 / math.sqrt(H)

    x = jax.random.normal(kx, (B, T, I), dtype=jnp.float32)
    w_ih = jax.random.uniform(k1, (4 * H, I), jnp.float32, -bound, bound)
    w_hh = jax.random.uniform(k2, (4 * H, H), jnp.float32, -bound, bound)
    b_ih = jax.random.uniform(k3, (4 * H,), jnp.float32, -bound, bound)
    b_hh = jax.random.uniform(k4, (4 * H,), jnp.float32, -bound, bound)
    w_out = jax.random.uniform(k5, (1, H), jnp.float32, -bound, bound)
    b_out = jax.random.uniform(k6, (1,), jnp.float32, -bound, bound)

    # Pre-bake weight layouts once (outside the forward hot path).
    params = prepare_params(w_ih, w_hh, b_ih, b_hh, w_out, b_out)

    out = model_forward(x, *params)
    out = jax.block_until_ready(out)

    ref = reference_forward(x, w_ih, w_hh, b_ih, b_hh, w_out, b_out)
    assert out.shape == (B, 1), out.shape
    assert jnp.allclose(out, ref, atol=2e-5, rtol=1e-4), (out, ref)

    print("KERNEL_OK")
</pallas_src>

<mosaic_0001>
module attributes {stable_mosaic.version = 11 : i64} {
  func.func @lstm_head_kernel(%arg0: memref<8x8x2xf32, #tpu.memory_space<vmem>>, %arg1: memref<2x128xf32, #tpu.memory_space<vmem>>, %arg2: memref<32x128xf32, #tpu.memory_space<vmem>>, %arg3: memref<1x128xf32, #tpu.memory_space<vmem>>, %arg4: memref<1x32xf32, #tpu.memory_space<vmem>>, %arg5: memref<1x1xf32, #tpu.memory_space<vmem>>, %arg6: memref<8x1xf32, #tpu.memory_space<vmem>>) attributes {dimension_semantics = [], scalar_prefetch = 0 : i64, scratch_operands = 0 : i64, tpu.core_type = #tpu.core_type<tc>} {
    %c0 = arith.constant 0 : index
    %c0_0 = arith.constant 0 : index
    %0 = vector.load %arg2[%c0, %c0_0] : memref<32x128xf32, #tpu.memory_space<vmem>>, vector<32x128xf32>
    %c0_1 = arith.constant 0 : index
    %c0_2 = arith.constant 0 : index
    %c0_3 = arith.constant 0 : index
    %1 = vector.load %arg0[%c0_1, %c0_2, %c0_3] : memref<8x8x2xf32, #tpu.memory_space<vmem>>, vector<8x8x2xf32>
    %2 = vector.shape_cast %1 : vector<8x8x2xf32> to vector<64x2xf32>
    %c0_4 = arith.constant 0 : index
    %c0_5 = arith.constant 0 : index
    %3 = vector.load %arg1[%c0_4, %c0_5] : memref<2x128xf32, #tpu.memory_space<vmem>>, vector<2x128xf32>
    %cst = arith.constant dense<0.000000e+00> : vector<64x128xf32>
    %4 = tpu.matmul %2, %3, %cst {dimension_numbers = #tpu.dot_dimension_numbers<[1], [0], [0], [1], [0, 0, 1, 1], [], []>} : vector<64x2xf32>, vector<2x128xf32>, vector<64x128xf32> -> vector<64x128xf32>
    %c0_6 = arith.constant 0 : index
    %c0_7 = arith.constant 0 : index
    %5 = vector.load %arg3[%c0_6, %c0_7] : memref<1x128xf32, #tpu.memory_space<vmem>>, vector<1x128xf32>
    %6 = vector.broadcast %5 : vector<1x128xf32> to vector<64x128xf32>
    %7 = arith.addf %4, %6 : vector<64x128xf32>
    %8 = vector.shape_cast %7 : vector<64x128xf32> to vector<8x8x128xf32>
    %cst_8 = arith.constant 0.000000e+00 : f32
    %9 = vector.broadcast %cst_8 : f32 to vector<8x32xf32>
    %cst_9 = arith.constant 0.000000e+00 : f32
    %10 = vector.broadcast %cst_9 : f32 to vector<8x32xf32>
    %11 = vector.extract_strided_slice %8 {offsets = [0, 0, 0], sizes = [8, 1, 128], strides = [1, 1, 1]} : vector<8x8x128xf32> to vector<8x1x128xf32>
    %12 = vector.shape_cast %11 : vector<8x1x128xf32> to vector<8x128xf32>
    %cst_10 = arith.constant dense<0.000000e+00> : vector<8x128xf32>
    %13 = tpu.matmul %9, %0, %cst_10 {dimension_numbers = #tpu.dot_dimension_numbers<[1], [0], [0], [1], [0, 0, 1, 1], [], []>} : vector<8x32xf32>, vector<32x128xf32>, vector<8x128xf32> -> vector<8x128xf32>
    %14 = arith.addf %12, %13 : vector<8x128xf32>
    %15 = arith.negf %14 : vector<8x128xf32>
    %16 = math.exp %15 : vector<8x128xf32>
    %cst_11 = arith.constant 1.000000e+00 : f32
    %17 = vector.broadcast %cst_11 : f32 to vector<8x128xf32>
    %18 = arith.addf %17, %16 : vector<8x128xf32>
    %19 = arith.divf %17, %18 : vector<8x128xf32>
    %20 = math.tanh %14 : vector<8x128xf32>
    %21 = vector.extract_strided_slice %19 {offsets = [0, 0], sizes = [8, 32], strides = [1, 1]} : vector<8x128xf32> to vector<8x32xf32>
    %22 = vector.extract_strided_slice %19 {offsets = [0, 32], sizes = [8, 32], strides = [1, 1]} : vector<8x128xf32> to vector<8x32xf32>
    %23 = vector.extract_strided_slice %20 {offsets = [0, 64], sizes = [8, 32], strides = [1, 1]} : vector<8x128xf32> to vector<8x32xf32>
    %24 = vector.extract_strided_slice %19 {offsets = [0, 96], sizes = [8, 32], strides = [1, 1]} : vector<8x128xf32> to vector<8x32xf32>
    %25 = arith.mulf %22, %10 : vector<8x32xf32>
    %26 = arith.mulf %21, %23 : vector<8x32xf32>
    %27 = arith.addf %25, %26 : vector<8x32xf32>
    %28 = math.tanh %27 : vector<8x32xf32>
    %29 = arith.mulf %24, %28 : vector<8x32xf32>
    %30 = vector.extract_strided_slice %8 {offsets = [0, 1, 0], sizes = [8, 1, 128], strides = [1, 1, 1]} : vector<8x8x128xf32> to vector<8x1x128xf32>
    %31 = vector.shape_cast %30 : vector<8x1x128xf32> to vector<8x128xf32>
    %cst_12 = arith.constant dense<0.000000e+00> : vector<8x128xf32>
    %32 = tpu.matmul %29, %0, %cst_12 {dimension_numbers = #tpu.dot_dimension_numbers<[1], [0], [0], [1], [0, 0, 1, 1], [], []>} : vector<8x32xf32>, vector<32x128xf32>, vector<8x128xf32> -> vector<8x128xf32>
    %33 = arith.addf %31, %32 : vector<8x128xf32>
    %34 = arith.negf %33 : vector<8x128xf32>
    %35 = math.exp %34 : vector<8x128xf32>
    %cst_13 = arith.constant 1.000000e+00 : f32
    %36 = vector.broadcast %cst_13 : f32 to vector<8x128xf32>
    %37 = arith.addf %36, %35 : vector<8x128xf32>
    %38 = arith.divf %36, %37 : vector<8x128xf32>
    %39 = math.tanh %33 : vector<8x128xf32>
    %40 = vector.extract_strided_slice %38 {offsets = [0, 0], sizes = [8, 32], strides = [1, 1]} : vector<8x128xf32> to vector<8x32xf32>
    %41 = vector.extract_strided_slice %38 {offsets = [0, 32], sizes = [8, 32], strides = [1, 1]} : vector<8x128xf32> to vector<8x32xf32>
    %42 = vector.extract_strided_slice %39 {offsets = [0, 64], sizes = [8, 32], strides = [1, 1]} : vector<8x128xf32> to vector<8x32xf32>
    %43 = vector.extract_strided_slice %38 {offsets = [0, 96], sizes = [8, 32], strides = [1, 1]} : vector<8x128xf32> to vector<8x32xf32>
    %44 = arith.mulf %41, %27 : vector<8x32xf32>
    %45 = arith.mulf %40, %42 : vector<8x32xf32>
    %46 = arith.addf %44, %45 : vector<8x32xf32>
    %47 = math.tanh %46 : vector<8x32xf32>
    %48 = arith.mulf %43, %47 : vector<8x32xf32>
    %49 = vector.extract_strided_slice %8 {offsets = [0, 2, 0], sizes = [8, 1, 128], strides = [1, 1, 1]} : vector<8x8x128xf32> to vector<8x1x128xf32>
    %50 = vector.shape_cast %49 : vector<8x1x128xf32> to vector<8x128xf32>
    %cst_14 = arith.constant dense<0.000000e+00> : vector<8x128xf32>
    %51 = tpu.matmul %48, %0, %cst_14 {dimension_numbers = #tpu.dot_dimension_numbers<[1], [0], [0], [1], [0, 0, 1, 1], [], []>} : vector<8x32xf32>, vector<32x128xf32>, vector<8x128xf32> -> vector<8x128xf32>
    %52 = arith.addf %50, %51 : vector<8x128xf32>
    %53 = arith.negf %52 : vector<8x128xf32>
    %54 = math.exp %53 : vector<8x128xf32>
    %cst_15 = arith.constant 1.000000e+00 : f32
    %55 = vector.broadcast %cst_15 : f32 to vector<8x128xf32>
    %56 = arith.addf %55, %54 : vector<8x128xf32>
    %57 = arith.divf %55, %56 : vector<8x128xf32>
    %58 = math.tanh %52 : vector<8x128xf32>
    %59 = vector.extract_strided_slice %57 {offsets = [0, 0], sizes = [8, 32], strides = [1, 1]} : vector<8x128xf32> to vector<8x32xf32>
    %60 = vector.extract_strided_slice %57 {offsets = [0, 32], sizes = [8, 32], strides = [1, 1]} : vector<8x128xf32> to vector<8x32xf32>
    %61 = vector.extract_strided_slice %58 {offsets = [0, 64], sizes = [8, 32], strides = [1, 1]} : vector<8x128xf32> to vector<8x32xf32>
    %62 = vector.extract_strided_slice %57 {offsets = [0, 96], sizes = [8, 32], strides = [1, 1]} : vector<8x128xf32> to vector<8x32xf32>
    %63 = arith.mulf %60, %46 : vector<8x32xf32>
    %64 = arith.mulf %59, %61 : vector<8x32xf32>
    %65 = arith.addf %63, %64 : vector<8x32xf32>
    %66 = math.tanh %65 : vector<8x32xf32>
    %67 = arith.mulf %62, %66 : vector<8x32xf32>
    %68 = vector.extract_strided_slice %8 {offsets = [0, 3, 0], sizes = [8, 1, 128], strides = [1, 1, 1]} : vector<8x8x128xf32> to vector<8x1x128xf32>
    %69 = vector.shape_cast %68 : vector<8x1x128xf32> to vector<8x128xf32>
    %cst_16 = arith.constant dense<0.000000e+00> : vector<8x128xf32>
    %70 = tpu.matmul %67, %0, %cst_16 {dimension_numbers = #tpu.dot_dimension_numbers<[1], [0], [0], [1], [0, 0, 1, 1], [], []>} : vector<8x32xf32>, vector<32x128xf32>, vector<8x128xf32> -> vector<8x128xf32>
    %71 = arith.addf %69, %70 : vector<8x128xf32>
    %72 = arith.negf %71 : vector<8x128xf32>
    %73 = math.exp %72 : vector<8x128xf32>
    %cst_17 = arith.constant 1.000000e+00 : f32
    %74 = vector.broadcast %cst_17 : f32 to vector<8x128xf32>
    %75 = arith.addf %74, %73 : vector<8x128xf32>
    %76 = arith.divf %74, %75 : vector<8x128xf32>
    %77 = math.tanh %71 : vector<8x128xf32>
    %78 = vector.extract_strided_slice %76 {offsets = [0, 0], sizes = [8, 32], strides = [1, 1]} : vector<8x128xf32> to vector<8x32xf32>
    %79 = vector.extract_strided_slice %76 {offsets = [0, 32], sizes = [8, 32], strides = [1, 1]} : vector<8x128xf32> to vector<8x32xf32>
    %80 = vector.extract_strided_slice %77 {offsets = [0, 64], sizes = [8, 32], strides = [1, 1]} : vector<8x128xf32> to vector<8x32xf32>
    %81 = vector.extract_strided_slice %76 {offsets = [0, 96], sizes = [8, 32], strides = [1, 1]} : vector<8x128xf32> to vector<8x32xf32>
    %82 = arith.mulf %79, %65 : vector<8x32xf32>
    %83 = arith.mulf %78, %80 : vector<8x32xf32>
    %84 = arith.addf %82, %83 : vector<8x32xf32>
    %85 = math.tanh %84 : vector<8x32xf32>
    %86 = arith.mulf %81, %85 : vector<8x32xf32>
    %87 = vector.extract_strided_slice %8 {offsets = [0, 4, 0], sizes = [8, 1, 128], strides = [1, 1, 1]} : vector<8x8x128xf32> to vector<8x1x128xf32>
    %88 = vector.shape_cast %87 : vector<8x1x128xf32> to vector<8x128xf32>
    %cst_18 = arith.constant dense<0.000000e+00> : vector<8x128xf32>
    %89 = tpu.matmul %86, %0, %cst_18 {dimension_numbers = #tpu.dot_dimension_numbers<[1], [0], [0], [1], [0, 0, 1, 1], [], []>} : vector<8x32xf32>, vector<32x128xf32>, vector<8x128xf32> -> vector<8x128xf32>
    %90 = arith.addf %88, %89 : vector<8x128xf32>
    %91 = arith.negf %90 : vector<8x128xf32>
    %92 = math.exp %91 : vector<8x128xf32>
    %cst_19 = arith.constant 1.000000e+00 : f32
    %93 = vector.broadcast %cst_19 : f32 to vector<8x128xf32>
    %94 = arith.addf %93, %92 : vector<8x128xf32>
    %95 = arith.divf %93, %94 : vector<8x128xf32>
    %96 = math.tanh %90 : vector<8x128xf32>
    %97 = vector.extract_strided_slice %95 {offsets = [0, 0], sizes = [8, 32], strides = [1, 1]} : vector<8x128xf32> to vector<8x32xf32>
    %98 = vector.extract_strided_slice %95 {offsets = [0, 32], sizes = [8, 32], strides = [1, 1]} : vector<8x128xf32> to vector<8x32xf32>
    %99 = vector.extract_strided_slice %96 {offsets = [0, 64], sizes = [8, 32], strides = [1, 1]} : vector<8x128xf32> to vector<8x32xf32>
    %100 = vector.extract_strided_slice %95 {offsets = [0, 96], sizes = [8, 32], strides = [1, 1]} : vector<8x128xf32> to vector<8x32xf32>
    %101 = arith.mulf %98, %84 : vector<8x32xf32>
    %102 = arith.mulf %97, %99 : vector<8x32xf32>
    %103 = arith.addf %101, %102 : vector<8x32xf32>
    %104 = math.tanh %103 : vector<8x32xf32>
    %105 = arith.mulf %100, %104 : vector<8x32xf32>
    %106 = vector.extract_strided_slice %8 {offsets = [0, 5, 0], sizes = [8, 1, 128], strides = [1, 1, 1]} : vector<8x8x128xf32> to vector<8x1x128xf32>
    %107 = vector.shape_cast %106 : vector<8x1x128xf32> to vector<8x128xf32>
    %cst_20 = arith.constant dense<0.000000e+00> : vector<8x128xf32>
    %108 = tpu.matmul %105, %0, %cst_20 {dimension_numbers = #tpu.dot_dimension_numbers<[1], [0], [0], [1], [0, 0, 1, 1], [], []>} : vector<8x32xf32>, vector<32x128xf32>, vector<8x128xf32> -> vector<8x128xf32>
    %109 = arith.addf %107, %108 : vector<8x128xf32>
    %110 = arith.negf %109 : vector<8x128xf32>
    %111 = math.exp %110 : vector<8x128xf32>
    %cst_21 = arith.constant 1.000000e+00 : f32
    %112 = vector.broadcast %cst_21 : f32 to vector<8x128xf32>
    %113 = arith.addf %112, %111 : vector<8x128xf32>
    %114 = arith.divf %112, %113 : vector<8x128xf32>
    %115 = math.tanh %109 : vector<8x128xf32>
    %116 = vector.extract_strided_slice %114 {offsets = [0, 0], sizes = [8, 32], strides = [1, 1]} : vector<8x128xf32> to vector<8x32xf32>
    %117 = vector.extract_strided_slice %114 {offsets = [0, 32], sizes = [8, 32], strides = [1, 1]} : vector<8x128xf32> to vector<8x32xf32>
    %118 = vector.extract_strided_slice %115 {offsets = [0, 64], sizes = [8, 32], strides = [1, 1]} : vector<8x128xf32> to vector<8x32xf32>
    %119 = vector.extract_strided_slice %114 {offsets = [0, 96], sizes = [8, 32], strides = [1, 1]} : vector<8x128xf32> to vector<8x32xf32>
    %120 = arith.mulf %117, %103 : vector<8x32xf32>
    %121 = arith.mulf %116, %118 : vector<8x32xf32>
    %122 = arith.addf %120, %121 : vector<8x32xf32>
    %123 = math.tanh %122 : vector<8x32xf32>
    %124 = arith.mulf %119, %123 : vector<8x32xf32>
    %125 = vector.extract_strided_slice %8 {offsets = [0, 6, 0], sizes = [8, 1, 128], strides = [1, 1, 1]} : vector<8x8x128xf32> to vector<8x1x128xf32>
    %126 = vector.shape_cast %125 : vector<8x1x128xf32> to vector<8x128xf32>
    %cst_22 = arith.constant dense<0.000000e+00> : vector<8x128xf32>
    %127 = tpu.matmul %124, %0, %cst_22 {dimension_numbers = #tpu.dot_dimension_numbers<[1], [0], [0], [1], [0, 0, 1, 1], [], []>} : vector<8x32xf32>, vector<32x128xf32>, vector<8x128xf32> -> vector<8x128xf32>
    %128 = arith.addf %126, %127 : vector<8x128xf32>
    %129 = arith.negf %128 : vector<8x128xf32>
    %130 = math.exp %129 : vector<8x128xf32>
    %cst_23 = arith.constant 1.000000e+00 : f32
    %131 = vector.broadcast %cst_23 : f32 to vector<8x128xf32>
    %132 = arith.addf %131, %130 : vector<8x128xf32>
    %133 = arith.divf %131, %132 : vector<8x128xf32>
    %134 = math.tanh %128 : vector<8x128xf32>
    %135 = vector.extract_strided_slice %133 {offsets = [0, 0], sizes = [8, 32], strides = [1, 1]} : vector<8x128xf32> to vector<8x32xf32>
    %136 = vector.extract_strided_slice %133 {offsets = [0, 32], sizes = [8, 32], strides = [1, 1]} : vector<8x128xf32> to vector<8x32xf32>
    %137 = vector.extract_strided_slice %134 {offsets = [0, 64], sizes = [8, 32], strides = [1, 1]} : vector<8x128xf32> to vector<8x32xf32>
    %138 = vector.extract_strided_slice %133 {offsets = [0, 96], sizes = [8, 32], strides = [1, 1]} : vector<8x128xf32> to vector<8x32xf32>
    %139 = arith.mulf %136, %122 : vector<8x32xf32>
    %140 = arith.mulf %135, %137 : vector<8x32xf32>
    %141 = arith.addf %139, %140 : vector<8x32xf32>
    %142 = math.tanh %141 : vector<8x32xf32>
    %143 = arith.mulf %138, %142 : vector<8x32xf32>
    %144 = vector.extract_strided_slice %8 {offsets = [0, 7, 0], sizes = [8, 1, 128], strides = [1, 1, 1]} : vector<8x8x128xf32> to vector<8x1x128xf32>
    %145 = vector.shape_cast %144 : vector<8x1x128xf32> to vector<8x128xf32>
    %cst_24 = arith.constant dense<0.000000e+00> : vector<8x128xf32>
    %146 = tpu.matmul %143, %0, %cst_24 {dimension_numbers = #tpu.dot_dimension_numbers<[1], [0], [0], [1], [0, 0, 1, 1], [], []>} : vector<8x32xf32>, vector<32x128xf32>, vector<8x128xf32> -> vector<8x128xf32>
    %147 = arith.addf %145, %146 : vector<8x128xf32>
    %148 = arith.negf %147 : vector<8x128xf32>
    %149 = math.exp %148 : vector<8x128xf32>
    %cst_25 = arith.constant 1.000000e+00 : f32
    %150 = vector.broadcast %cst_25 : f32 to vector<8x128xf32>
    %151 = arith.addf %150, %149 : vector<8x128xf32>
    %152 = arith.divf %150, %151 : vector<8x128xf32>
    %153 = math.tanh %147 : vector<8x128xf32>
    %154 = vector.extract_strided_slice %152 {offsets = [0, 0], sizes = [8, 32], strides = [1, 1]} : vector<8x128xf32> to vector<8x32xf32>
    %155 = vector.extract_strided_slice %152 {offsets = [0, 32], sizes = [8, 32], strides = [1, 1]} : vector<8x128xf32> to vector<8x32xf32>
    %156 = vector.extract_strided_slice %153 {offsets = [0, 64], sizes = [8, 32], strides = [1, 1]} : vector<8x128xf32> to vector<8x32xf32>
    %157 = vector.extract_strided_slice %152 {offsets = [0, 96], sizes = [8, 32], strides = [1, 1]} : vector<8x128xf32> to vector<8x32xf32>
    %158 = arith.mulf %155, %141 : vector<8x32xf32>
    %159 = arith.mulf %154, %156 : vector<8x32xf32>
    %160 = arith.addf %158, %159 : vector<8x32xf32>
    %161 = math.tanh %160 : vector<8x32xf32>
    %162 = arith.mulf %157, %161 : vector<8x32xf32>
    %c0_26 = arith.constant 0 : index
    %c0_27 = arith.constant 0 : index
    %163 = vector.load %arg4[%c0_26, %c0_27] : memref<1x32xf32, #tpu.memory_space<vmem>>, vector<1x32xf32>
    %164 = vector.broadcast %163 : vector<1x32xf32> to vector<8x32xf32>
    %165 = arith.mulf %162, %164 : vector<8x32xf32>
    %cst_28 = arith.constant dense<0.000000e+00> : vector<8xf32>
    %166 = vector.multi_reduction <add>, %165, %cst_28 [1] : vector<8x32xf32> to vector<8xf32>
    %167 = vector.shape_cast %166 : vector<8xf32> to vector<8x1xf32>
    %c0_29 = arith.constant 0 : index
    %c0_30 = arith.constant 0 : index
    %168 = vector.load %arg5[%c0_29, %c0_30] : memref<1x1xf32, #tpu.memory_space<vmem>>, vector<1x1xf32>
    %169 = vector.broadcast %168 : vector<1x1xf32> to vector<8x1xf32>
    %170 = arith.addf %167, %169 : vector<8x1xf32>
    %c0_31 = arith.constant 0 : index
    %c0_32 = arith.constant 0 : index
    %171 = vector.load %arg6[%c0_31, %c0_32] : memref<8x1xf32, #tpu.memory_space<vmem>>, vector<8x1xf32>
    tpu.vector_store %arg6[%c0_31, %c0_32], %170 {strides = array<i32>} : memref<8x1xf32, #tpu.memory_space<vmem>>, vector<8x1xf32>,
    return
  }
}

</mosaic_0001>

<llo_original>
// kernel: model_forward.1
$region0: #{model_forward.1}
  #allocation0 [shape = 'u32[]', space=smem, size = 0x4, offset = 0x4, fixed_abs, tag = 'smem constant byte address 0x4 - core index']
  #allocation1 [shape = 'u32[72,128]{1,0:T(1,128)}', space=vmem, size = 0x9000, scoped, tag = 'internal scratch']
  #allocation2 [shape = 'f32[1,1]{1,0:T(1,128)S(1)}', space=vmem, size = 0x200, scoped, tag = 'scoped memory for model_forward.1']
  %s0 = inlined_call_operand.vmem [shape: f32[8,8,2], index: 0, kind: input, shape index: {}]
  %s1 = inlined_call_operand.vmem [shape: f32[2,128], index: 1, kind: input, shape index: {}]
  %s2 = inlined_call_operand.vmem [shape: f32[32,128], index: 2, kind: input, shape index: {}]
  %s3 = inlined_call_operand.vmem [shape: f32[1,128], index: 3, kind: input, shape index: {}]
  %s4 = inlined_call_operand.vmem [shape: f32[1,32], index: 4, kind: input, shape index: {}]
  %s5 = inlined_call_operand.<no memory space> [shape: f32[1,1], index: 5, kind: input, shape index: {}]
  %s6 = inlined_call_operand.vmem [shape: f32[8,1], index: 6, kind: output, shape index: {}]
  %s7 = sld [smem:[#allocation0]]
  $region34: #{model_forward.1} parent=0
    _
  %s9 = ssub.s32 1, %s7
  %s10 = scalar_select 0, %s9, %s7
  %v11 = vstv %s5
  %12 = vst [vmem:[#allocation2] sm:$0x1] %v11
  // Predicated region
  $region2: #{model_forward.1} parent=0 // pred_check
    _
  $region3: #{model_forward.1} parent=0 // pred_check_branch
    %14 = sbr.rel (0) target = $region5
  $region4: #{model_forward.1} parent=0 // pred_region
    _
  $region5: #{model_forward.1} parent=0 // pred_fallthru
    _
  // Predicated region
  $region6: #{model_forward.1} parent=0 // pred_check
    _
  $region7: #{model_forward.1} parent=0 // pred_check_branch
    %16 = sbr.rel (0) target = $region9
  $region8: #{model_forward.1} parent=0 // pred_region
    _
  $region9: #{model_forward.1} parent=0 // pred_fallthru
    _
  // Predicated region
  $region10: #{model_forward.1} parent=0 // pred_check
    _
  $region11: #{model_forward.1} parent=0 // pred_check_branch
    %18 = sbr.rel (0) target = $region13
  $region12: #{model_forward.1} parent=0 // pred_region
    _
  $region13: #{model_forward.1} parent=0 // pred_fallthru
    _
  // Predicated region
  $region14: #{model_forward.1} parent=0 // pred_check
    _
  $region15: #{model_forward.1} parent=0 // pred_check_branch
    %20 = sbr.rel (0) target = $region17
  $region16: #{model_forward.1} parent=0 // pred_region
    _
  $region17: #{model_forward.1} parent=0 // pred_fallthru
    _
  // Predicated region
  $region18: #{model_forward.1} parent=0 // pred_check
    _
  $region19: #{model_forward.1} parent=0 // pred_check_branch
    %22 = sbr.rel (0) target = $region21
  $region20: #{model_forward.1} parent=0 // pred_region
    _
  $region21: #{model_forward.1} parent=0 // pred_fallthru
    _
  // Predicated region
  $region22: #{model_forward.1} parent=0 // pred_check
    _
  $region23: #{model_forward.1} parent=0 // pred_check_branch
    %24 = sbr.rel (0) target = $region25
  $region24: #{model_forward.1} parent=0 // pred_region
    _
  $region25: #{model_forward.1} parent=0 // pred_fallthru
    _
  %v25 = vld [vmem:[%s2] sm:$0xff]
  %v26 = vld [vmem:[%s2 + $0x8] sm:$0xff]
  %v27 = vld [vmem:[%s2 + $0x10] sm:$0xff]
  %v28 = vld [vmem:[%s2 + $0x18] sm:$0xff]
  %v29 = vld [vmem:[%s0] sm:$0xff]
  %v30 = vld [vmem:[%s0 + $0x8] sm:$0xff]
  %v31 = vld [vmem:[%s0 + $0x10] sm:$0xff]
  %v32 = vld [vmem:[%s0 + $0x18] sm:$0xff]
  %v33 = vld [vmem:[%s0 + $0x20] sm:$0xff]
  %v34 = vld [vmem:[%s0 + $0x28] sm:$0xff]
  %v35 = vld [vmem:[%s0 + $0x30] sm:$0xff]
  %v36 = vld [vmem:[%s0 + $0x38] sm:$0xff]
  %v37 = vld [vmem:[%s1] sm:$0x3]
  %v38 = vld [vmem:[%s3] sm:$0x1]
  %v40 = vperm.slane %v38, 0
  %vm42 = vcmask 15360
  %v44 = vsel %vm42, %v29, 0
  %v47 = vsel %vm42, %v30, 0
  %v50 = vsel %vm42, %v31, 0
  %v53 = vsel %vm42, %v32, 0
  %v56 = vsel %vm42, %v33, 0
  %v59 = vsel %vm42, %v34, 0
  %v62 = vsel %vm42, %v35, 0
  %v65 = vsel %vm42, %v36, 0
  %vm67 = vcmask 1041408
  %v69 = vsel %vm67, %v37, 0
  %71 = vmatpush.msra.mxu0 0.0
  %72 = vmatpush.msra.mxu0 0.0
  %73 = vmatpush.msra.mxu0 0.0
  %74 = vmatpush.msra.mxu0 0.0
  %75 = vmatpush.msra.mxu0 0.0
  %76 = vmatpush.msra.mxu0 0.0
  %77 = vmatpush.msra.mxu0 0.0
  %78 = vmatpush.msra.mxu0 0.0
  %79 = vmatpush.msra.mxu0 0.0
  %80 = vmatpush.msra.mxu0 0.0
  %81 = vmatpush.msra.mxu0 0.0
  %82 = vmatpush.msra.mxu0 0.0
  %83 = vmatpush.msra.mxu0 0.0
  %84 = vmatpush.msra.mxu0 0.0
  %85 = vmatpush.msra.mxu0 0.0
  %86 = vmatpush.msra.mxu0 %v69
  %87 = vmatmul.f32.gmra.mxu0 %v44
  %v88 = vpop.f32.mrf.mxu0
  %v89 = vadd.f32 %v40, %v88
  %90 = vmatmul.f32.gmra.mxu0 %v47
  %v91 = vpop.f32.mrf.mxu0
  %v92 = vadd.f32 %v40, %v91
  %93 = vmatmul.f32.gmra.mxu0 %v50
  %v94 = vpop.f32.mrf.mxu0
  %v95 = vadd.f32 %v40, %v94
  %96 = vmatmul.f32.gmra.mxu0 %v53
  %v97 = vpop.f32.mrf.mxu0
  %v98 = vadd.f32 %v40, %v97
  %99 = vmatmul.f32.gmra.mxu0 %v56
  %v100 = vpop.f32.mrf.mxu0
  %v101 = vadd.f32 %v40, %v100
  %102 = vmatmul.f32.gmra.mxu0 %v59
  %v103 = vpop.f32.mrf.mxu0
  %v104 = vadd.f32 %v40, %v103
  %105 = vmatmul.f32.gmra.mxu0 %v62
  %v106 = vpop.f32.mrf.mxu0
  %v107 = vadd.f32 %v40, %v106
  %108 = vmatmul.f32.gmra.mxu0 %v65
  %v109 = vpop.f32.mrf.mxu0
  %v110 = vadd.f32 %v40, %v109
  %111 = vdwg.mxu0
  %vm112 = vcmask 261120
  %v114 = vsel %vm112, 0.0, 0
  %116 = vmatpush.msra.mxu0 0.0
  %117 = vmatpush.msra.mxu0 0.0
  %118 = vmatpush.msra.mxu0 0.0
  %119 = vmatpush.msra.mxu0 0.0
  %120 = vmatpush.msra.mxu0 0.0
  %121 = vmatpush.msra.mxu0 0.0
  %122 = vmatpush.msra.mxu0 0.0
  %123 = vmatpush.msra.mxu0 0.0
  %124 = vmatpush.msra.mxu0 0.0
  %125 = vmatpush.msra.mxu0 0.0
  %126 = vmatpush.msra.mxu0 0.0
  %127 = vmatpush.msra.mxu0 0.0
  %128 = vmatpush.msra.mxu0 %v28
  %129 = vmatpush.msra.mxu0 %v27
  %130 = vmatpush.msra.mxu0 %v26
  %131 = vmatpush.msra.mxu0 %v25
  %132 = vmatmul.f32.gmra.mxu0 %v114
  %v133 = vpop.f32.mrf.mxu0
  %v134 = vadd.f32 0.0, %v133
  %135 = vdwg.mxu0
  %v137 = vrot.slane %v134, 1
  %v138 = vrot.slane %v134, 2
  %v139 = vrot.slane %v134, 3
  %v140 = vrot.slane %v134, 4
  %v141 = vrot.slane %v134, 5
  %v142 = vrot.slane %v134, 6
  %v143 = vrot.slane %v134, 7
  %v152 = vadd.f32 %v89, %v134
  %v153 = vadd.f32 %v92, %v137
  %v154 = vadd.f32 %v95, %v138
  %v155 = vadd.f32 %v98, %v139
  %v156 = vadd.f32 %v101, %v140
  %v157 = vadd.f32 %v104, %v141
  %v158 = vadd.f32 %v107, %v142
  %v159 = vadd.f32 %v110, %v143
  %v160 = vxor.u32 %v152, 2147483648
  %v161 = vxor.u32 %v153, 2147483648
  %v162 = vxor.u32 %v154, 2147483648
  %v163 = vxor.u32 %v155, 2147483648
  %v164 = vxor.u32 %v156, 2147483648
  %v165 = vxor.u32 %v157, 2147483648
  %v166 = vxor.u32 %v158, 2147483648
  %v167 = vxor.u32 %v159, 2147483648
  %v168 = vmul.f32 %v160, 1.442695
  %v169 = vpow.pop %v168
  %v170 = vmul.f32 %v161, 1.442695
  %v171 = vpow.pop %v170
  %v172 = vmul.f32 %v162, 1.442695
  %v173 = vpow.pop %v172
  %v174 = vmul.f32 %v163, 1.442695
  %v175 = vpow.pop %v174
  %v176 = vmul.f32 %v164, 1.442695
  %v177 = vpow.pop %v176
  %v178 = vmul.f32 %v165, 1.442695
  %v179 = vpow.pop %v178
  %v180 = vmul.f32 %v166, 1.442695
  %v181 = vpow.pop %v180
  %v182 = vmul.f32 %v167, 1.442695
  %v183 = vpow.pop %v182
  %v184 = vadd.f32 %v169, 1.0
  %v185 = vadd.f32 %v171, 1.0
  %v186 = vadd.f32 %v173, 1.0
  %v187 = vadd.f32 %v175, 1.0
  %v188 = vadd.f32 %v177, 1.0
  %v189 = vadd.f32 %v179, 1.0
  %v190 = vadd.f32 %v181, 1.0
  %v191 = vadd.f32 %v183, 1.0
  %v192 = vrcp.pop %v184
  %v193 = vmul.f32 %v184, %v192
  %v194 = vsub.f32 1.0, %v193
  %v195 = vmul.f32 %v192, %v194
  %v196 = vadd.f32 %v192, %v195
  %vm197 = vweird.f32 %v184
  %vm198 = vweird.f32 %v192
  %vm199 = vmor %vm197, %vm198
  %v200 = vsel %vm199, %v192, %v196
  %v201 = vand.u32 2147483647, %v184
  %vm202 = vcmp.eq.f32.partialorder %v201, 8.507059e+37
  %v203 = vand.u32 %v184, 2147483648
  %v204 = vor.u32 1.1754944e-38, %v203
  %v205 = vsel %vm202, %v204, %v200
  %v206 = vmul.f32 1.0, %v205
  %v207 = vrcp.pop %v185
  %v208 = vmul.f32 %v185, %v207
  %v209 = vsub.f32 1.0, %v208
  %v210 = vmul.f32 %v207, %v209
  %v211 = vadd.f32 %v207, %v210
  %vm212 = vweird.f32 %v185
  %vm213 = vweird.f32 %v207
  %vm214 = vmor %vm212, %vm213
  %v215 = vsel %vm214, %v207, %v211
  %v216 = vand.u32 2147483647, %v185
  %vm217 = vcmp.eq.f32.partialorder %v216, 8.507059e+37
  %v218 = vand.u32 %v185, 2147483648
  %v219 = vor.u32 1.1754944e-38, %v218
  %v220 = vsel %vm217, %v219, %v215
  %v221 = vmul.f32 1.0, %v220
  %v222 = vrcp.pop %v186
  %v223 = vmul.f32 %v186, %v222
  %v224 = vsub.f32 1.0, %v223
  %v225 = vmul.f32 %v222, %v224
  %v226 = vadd.f32 %v222, %v225
  %vm227 = vweird.f32 %v186
  %vm228 = vweird.f32 %v222
  %vm229 = vmor %vm227, %vm228
  %v230 = vsel %vm229, %v222, %v226
  %v231 = vand.u32 2147483647, %v186
  %vm232 = vcmp.eq.f32.partialorder %v231, 8.507059e+37
  %v233 = vand.u32 %v186, 2147483648
  %v234 = vor.u32 1.1754944e-38, %v233
  %v235 = vsel %vm232, %v234, %v230
  %v236 = vmul.f32 1.0, %v235
  %v237 = vrcp.pop %v187
  %v238 = vmul.f32 %v187, %v237
  %v239 = vsub.f32 1.0, %v238
  %v240 = vmul.f32 %v237, %v239
  %v241 = vadd.f32 %v237, %v240
  %vm242 = vweird.f32 %v187
  %vm243 = vweird.f32 %v237
  %vm244 = vmor %vm242, %vm243
  %v245 = vsel %vm244, %v237, %v241
  %v246 = vand.u32 2147483647, %v187
  %vm247 = vcmp.eq.f32.partialorder %v246, 8.507059e+37
  %v248 = vand.u32 %v187, 2147483648
  %v249 = vor.u32 1.1754944e-38, %v248
  %v250 = vsel %vm247, %v249, %v245
  %v251 = vmul.f32 1.0, %v250
  %v252 = vrcp.pop %v188
  %v253 = vmul.f32 %v188, %v252
  %v254 = vsub.f32 1.0, %v253
  %v255 = vmul.f32 %v252, %v254
  %v256 = vadd.f32 %v252, %v255
  %vm257 = vweird.f32 %v188
  %vm258 = vweird.f32 %v252
  %vm259 = vmor %vm257, %vm258
  %v260 = vsel %vm259, %v252, %v256
  %v261 = vand.u32 2147483647, %v188
  %vm262 = vcmp.eq.f32.partialorder %v261, 8.507059e+37
  %v263 = vand.u32 %v188, 2147483648
  %v264 = vor.u32 1.1754944e-38, %v263
  %v265 = vsel %vm262, %v264, %v260
  %v266 = vmul.f32 1.0, %v265
  %v267 = vrcp.pop %v189
  %v268 = vmul.f32 %v189, %v267
  %v269 = vsub.f32 1.0, %v268
  %v270 = vmul.f32 %v267, %v269
  %v271 = vadd.f32 %v267, %v270
  %vm272 = vweird.f32 %v189
  %vm273 = vweird.f32 %v267
  %vm274 = vmor %vm272, %vm273
  %v275 = vsel %vm274, %v267, %v271
  %v276 = vand.u32 2147483647, %v189
  %vm277 = vcmp.eq.f32.partialorder %v276, 8.507059e+37
  %v278 = vand.u32 %v189, 2147483648
  %v279 = vor.u32 1.1754944e-38, %v278
  %v280 = vsel %vm277, %v279, %v275
  %v281 = vmul.f32 1.0, %v280
  %v282 = vrcp.pop %v190
  %v283 = vmul.f32 %v190, %v282
  %v284 = vsub.f32 1.0, %v283
  %v285 = vmul.f32 %v282, %v284
  %v286 = vadd.f32 %v282, %v285
  %vm287 = vweird.f32 %v190
  %vm288 = vweird.f32 %v282
  %vm289 = vmor %vm287, %vm288
  %v290 = vsel %vm289, %v282, %v286
  %v291 = vand.u32 2147483647, %v190
  %vm292 = vcmp.eq.f32.partialorder %v291, 8.507059e+37
  %v293 = vand.u32 %v190, 2147483648
  %v294 = vor.u32 1.1754944e-38, %v293
  %v295 = vsel %vm292, %v294, %v290
  %v296 = vmul.f32 1.0, %v295
  %v297 = vrcp.pop %v191
  %v298 = vmul.f32 %v191, %v297
  %v299 = vsub.f32 1.0, %v298
  %v300 = vmul.f32 %v297, %v299
  %v301 = vadd.f32 %v297, %v300
  %vm302 = vweird.f32 %v191
  %vm303 = vweird.f32 %v297
  %vm304 = vmor %vm302, %vm303
  %v305 = vsel %vm304, %v297, %v301
  %v306 = vand.u32 2147483647, %v191
  %vm307 = vcmp.eq.f32.partialorder %v306, 8.507059e+37
  %v308 = vand.u32 %v191, 2147483648
  %v309 = vor.u32 1.1754944e-38, %v308
  %v310 = vsel %vm307, %v309, %v305
  %v311 = vmul.f32 1.0, %v310
  %v312 = vtanh.pop %v152
  %v313 = vtanh.pop %v153
  %v314 = vtanh.pop %v154
  %v315 = vtanh.pop %v155
  %v316 = vtanh.pop %v156
  %v317 = vtanh.pop %v157
  %v318 = vtanh.pop %v158
  %v319 = vtanh.pop %v159
  %v320 = vmul.f32 %v206, 0.0
  %v321 = vmul.f32 %v221, 0.0
  %v322 = vmul.f32 %v236, 0.0
  %v323 = vmul.f32 %v251, 0.0
  %v324 = vmul.f32 %v266, 0.0
  %v325 = vmul.f32 %v281, 0.0
  %v326 = vmul.f32 %v296, 0.0
  %v327 = vmul.f32 %v311, 0.0
  %336 = vrot.lane.b32.xlu0 %v312, 64
  %v337 = vpop.permute.xlu0 %336
  %338 = vrot.lane.b32.xlu0 %v313, 64
  %v339 = vpop.permute.xlu0 %338
  %340 = vrot.lane.b32.xlu0 %v314, 64
  %v341 = vpop.permute.xlu0 %340
  %342 = vrot.lane.b32.xlu0 %v315, 64
  %v343 = vpop.permute.xlu0 %342
  %344 = vrot.lane.b32.xlu0 %v316, 64
  %v345 = vpop.permute.xlu0 %344
  %346 = vrot.lane.b32.xlu0 %v317, 64
  %v347 = vpop.permute.xlu0 %346
  %348 = vrot.lane.b32.xlu0 %v318, 64
  %v349 = vpop.permute.xlu0 %348
  %350 = vrot.lane.b32.xlu0 %v319, 64
  %v351 = vpop.permute.xlu0 %350
  %v360 = vmul.f32 %v206, %v337
  %v361 = vmul.f32 %v221, %v339
  %v362 = vmul.f32 %v236, %v341
  %v363 = vmul.f32 %v251, %v343
  %v364 = vmul.f32 %v266, %v345
  %v365 = vmul.f32 %v281, %v347
  %v366 = vmul.f32 %v296, %v349
  %v367 = vmul.f32 %v311, %v351
  %376 = vrot.lane.b32.xlu0 %v360, 32
  %v377 = vpop.permute.xlu0 %376
  %378 = vrot.lane.b32.xlu0 %v361, 32
  %v379 = vpop.permute.xlu0 %378
  %380 = vrot.lane.b32.xlu0 %v362, 32
  %v381 = vpop.permute.xlu0 %380
  %382 = vrot.lane.b32.xlu0 %v363, 32
  %v383 = vpop.permute.xlu0 %382
  %384 = vrot.lane.b32.xlu0 %v364, 32
  %v385 = vpop.permute.xlu0 %384
  %386 = vrot.lane.b32.xlu0 %v365, 32
  %v387 = vpop.permute.xlu0 %386
  %388 = vrot.lane.b32.xlu0 %v366, 32
  %v389 = vpop.permute.xlu0 %388
  %390 = vrot.lane.b32.xlu0 %v367, 32
  %v391 = vpop.permute.xlu0 %390
  %v400 = vadd.f32 %v320, %v377
  %v401 = vadd.f32 %v321, %v379
  %v402 = vadd.f32 %v322, %v381
  %v403 = vadd.f32 %v323, %v383
  %v404 = vadd.f32 %v324, %v385
  %v405 = vadd.f32 %v325, %v387
  %v406 = vadd.f32 %v326, %v389
  %v407 = vadd.f32 %v327, %v391
  %v408 = vtanh.pop %v400
  %v409 = vtanh.pop %v401
  %v410 = vtanh.pop %v402
  %v411 = vtanh.pop %v403
  %v412 = vtanh.pop %v404
  %v413 = vtanh.pop %v405
  %v414 = vtanh.pop %v406
  %v415 = vtanh.pop %v407
  %424 = vrot.lane.b32.xlu0 %v408, 64
  %v425 = vpop.permute.xlu0 %424
  %426 = vrot.lane.b32.xlu0 %v409, 64
  %v427 = vpop.permute.xlu0 %426
  %428 = vrot.lane.b32.xlu0 %v410, 64
  %v429 = vpop.permute.xlu0 %428
  %430 = vrot.lane.b32.xlu0 %v411, 64
  %v431 = vpop.permute.xlu0 %430
  %432 = vrot.lane.b32.xlu0 %v412, 64
  %v433 = vpop.permute.xlu0 %432
  %434 = vrot.lane.b32.xlu0 %v413, 64
  %v435 = vpop.permute.xlu0 %434
  %436 = vrot.lane.b32.xlu0 %v414, 64
  %v437 = vpop.permute.xlu0 %436
  %438 = vrot.lane.b32.xlu0 %v415, 64
  %v439 = vpop.permute.xlu0 %438
  %v448 = vmul.f32 %v206, %v425
  %v449 = vmul.f32 %v221, %v427
  %v450 = vmul.f32 %v236, %v429
  %v451 = vmul.f32 %v251, %v431
  %v452 = vmul.f32 %v266, %v433
  %v453 = vmul.f32 %v281, %v435
  %v454 = vmul.f32 %v296, %v437
  %v455 = vmul.f32 %v311, %v439
  %v464 = vrot.slane %v449, 7
  %vm465 = vcmask 1041409
  %v466 = vsel %vm465, %v464, %v448
  %v467 = vrot.slane %v450, 6
  %vm468 = vcmask 1042434
  %v469 = vsel %vm468, %v467, %v466
  %v470 = vrot.slane %v451, 5
  %vm471 = vcmask 1043459
  %v472 = vsel %vm471, %v470, %v469
  %v473 = vrot.slane %v452, 4
  %vm474 = vcmask 1044484
  %v475 = vsel %vm474, %v473, %v472
  %v476 = vrot.slane %v453, 3
  %vm477 = vcmask 1045509
  %v478 = vsel %vm477, %v476, %v475
  %v479 = vrot.slane %v454, 2
  %vm480 = vcmask 1046534
  %v481 = vsel %vm480, %v479, %v478
  %v482 = vrot.slane %v455, 1
  %vm483 = vcmask 1047559
  %v484 = vsel %vm483, %v482, %v481
  %485 = vrot.lane.b32.xlu0 %v484, 32
  %v486 = vpop.permute.xlu0 %485
  %v487 = vsel %vm112, %v486, 0
  %489 = vmatpush.msra.mxu0 0.0
  %490 = vmatpush.msra.mxu0 0.0
  %491 = vmatpush.msra.mxu0 0.0
  %492 = vmatpush.msra.mxu0 0.0
  %493 = vmatpush.msra.mxu0 0.0
  %494 = vmatpush.msra.mxu0 0.0
  %495 = vmatpush.msra.mxu0 0.0
  %496 = vmatpush.msra.mxu0 0.0
  %497 = vmatpush.msra.mxu0 0.0
  %498 = vmatpush.msra.mxu0 0.0
  %499 = vmatpush.msra.mxu0 0.0
  %500 = vmatpush.msra.mxu0 0.0
  %501 = vmatpush.msra.mxu0 %v28
  %502 = vmatpush.msra.mxu0 %v27
  %503 = vmatpush.msra.mxu0 %v26
  %504 = vmatpush.msra.mxu0 %v25
  %505 = vmatmul.f32.gmra.mxu0 %v487
  %v506 = vpop.f32.mrf.mxu0
  %v507 = vadd.f32 0.0, %v506
  %508 = vdwg.mxu0
  %v510 = vrot.slane %v507, 7
  %v511 = vrot.slane %v507, 1
  %v512 = vrot.slane %v507, 2
  %v513 = vrot.slane %v507, 3
  %v514 = vrot.slane %v507, 4
  %v515 = vrot.slane %v507, 5
  %v516 = vrot.slane %v507, 6
  %v525 = vadd.f32 %v89, %v510
  %v526 = vadd.f32 %v92, %v507
  %v527 = vadd.f32 %v95, %v511
  %v528 = vadd.f32 %v98, %v512
  %v529 = vadd.f32 %v101, %v513
  %v530 = vadd.f32 %v104, %v514
  %v531 = vadd.f32 %v107, %v515
  %v532 = vadd.f32 %v110, %v516
  %v533 = vxor.u32 %v525, 2147483648
  %v534 = vxor.u32 %v526, 2147483648
  %v535 = vxor.u32 %v527, 2147483648
  %v536 = vxor.u32 %v528, 2147483648
  %v537 = vxor.u32 %v529, 2147483648
  %v538 = vxor.u32 %v530, 2147483648
  %v539 = vxor.u32 %v531, 2147483648
  %v540 = vxor.u32 %v532, 2147483648
  %v541 = vmul.f32 %v533, 1.442695
  %v542 = vpow.pop %v541
  %v543 = vmul.f32 %v534, 1.442695
  %v544 = vpow.pop %v543
  %v545 = vmul.f32 %v535, 1.442695
  %v546 = vpow.pop %v545
  %v547 = vmul.f32 %v536, 1.442695
  %v548 = vpow.pop %v547
  %v549 = vmul.f32 %v537, 1.442695
  %v550 = vpow.pop %v549
  %v551 = vmul.f32 %v538, 1.442695
  %v552 = vpow.pop %v551
  %v553 = vmul.f32 %v539, 1.442695
  %v554 = vpow.pop %v553
  %v555 = vmul.f32 %v540, 1.442695
  %v556 = vpow.pop %v555
  %v557 = vadd.f32 %v542, 1.0
  %v558 = vadd.f32 %v544, 1.0
  %v559 = vadd.f32 %v546, 1.0
  %v560 = vadd.f32 %v548, 1.0
  %v561 = vadd.f32 %v550, 1.0
  %v562 = vadd.f32 %v552, 1.0
  %v563 = vadd.f32 %v554, 1.0
  %v564 = vadd.f32 %v556, 1.0
  %v565 = vrcp.pop %v557
  %v566 = vmul.f32 %v557, %v565
  %v567 = vsub.f32 1.0, %v566
  %v568 = vmul.f32 %v565, %v567
  %v569 = vadd.f32 %v565, %v568
  %vm570 = vweird.f32 %v557
  %vm571 = vweird.f32 %v565
  %vm572 = vmor %vm570, %vm571
  %v573 = vsel %vm572, %v565, %v569
  %v574 = vand.u32 2147483647, %v557
  %vm575 = vcmp.eq.f32.partialorder %v574, 8.507059e+37
  %v576 = vand.u32 %v557, 2147483648
  %v577 = vor.u32 1.1754944e-38, %v576
  %v578 = vsel %vm575, %v577, %v573
  %v579 = vmul.f32 1.0, %v578
  %v580 = vrcp.pop %v558
  %v581 = vmul.f32 %v558, %v580
  %v582 = vsub.f32 1.0, %v581
  %v583 = vmul.f32 %v580, %v582
  %v584 = vadd.f32 %v580, %v583
  %vm585 = vweird.f32 %v558
  %vm586 = vweird.f32 %v580
  %vm587 = vmor %vm585, %vm586
  %v588 = vsel %vm587, %v580, %v584
  %v589 = vand.u32 2147483647, %v558
  %vm590 = vcmp.eq.f32.partialorder %v589, 8.507059e+37
  %v591 = vand.u32 %v558, 2147483648
  %v592 = vor.u32 1.1754944e-38, %v591
  %v593 = vsel %vm590, %v592, %v588
  %v594 = vmul.f32 1.0, %v593
  %v595 = vrcp.pop %v559
  %v596 = vmul.f32 %v559, %v595
  %v597 = vsub.f32 1.0, %v596
  %v598 = vmul.f32 %v595, %v597
  %v599 = vadd.f32 %v595, %v598
  %vm600 = vweird.f32 %v559
  %vm601 = vweird.f32 %v595
  %vm602 = vmor %vm600, %vm601
  %v603 = vsel %vm602, %v595, %v599
  %v604 = vand.u32 2147483647, %v559
  %vm605 = vcmp.eq.f32.partialorder %v604, 8.507059e+37
  %v606 = vand.u32 %v559, 2147483648
  %v607 = vor.u32 1.1754944e-38, %v606
  %v608 = vsel %vm605, %v607, %v603
  %v609 = vmul.f32 1.0, %v608
  %v610 = vrcp.pop %v560
  %v611 = vmul.f32 %v560, %v610
  %v612 = vsub.f32 1.0, %v611
  %v613 = vmul.f32 %v610, %v612
  %v614 = vadd.f32 %v610, %v613
  %vm615 = vweird.f32 %v560
  %vm616 = vweird.f32 %v610
  %vm617 = vmor %vm615, %vm616
  %v618 = vsel %vm617, %v610, %v614
  %v619 = vand.u32 2147483647, %v560
  %vm620 = vcmp.eq.f32.partialorder %v619, 8.507059e+37
  %v621 = vand.u32 %v560, 2147483648
  %v622 = vor.u32 1.1754944e-38, %v621
  %v623 = vsel %vm620, %v622, %v618
  %v624 = vmul.f32 1.0, %v623
  %v625 = vrcp.pop %v561
  %v626 = vmul.f32 %v561, %v625
  %v627 = vsub.f32 1.0, %v626
  %v628 = vmul.f32 %v625, %v627
  %v629 = vadd.f32 %v625, %v628
  %vm630 = vweird.f32 %v561
  %vm631 = vweird.f32 %v625
  %vm632 = vmor %vm630, %vm631
  %v633 = vsel %vm632, %v625, %v629
  %v634 = vand.u32 2147483647, %v561
  %vm635 = vcmp.eq.f32.partialorder %v634, 8.507059e+37
  %v636 = vand.u32 %v561, 2147483648
  %v637 = vor.u32 1.1754944e-38, %v636
  %v638 = vsel %vm635, %v637, %v633
  %v639 = vmul.f32 1.0, %v638
  %v640 = vrcp.pop %v562
  %v641 = vmul.f32 %v562, %v640
  %v642 = vsub.f32 1.0, %v641
  %v643 = vmul.f32 %v640, %v642
  %v644 = vadd.f32 %v640, %v643
  %vm645 = vweird.f32 %v562
  %vm646 = vweird.f32 %v640
  %vm647 = vmor %vm645, %vm646
  %v648 = vsel %vm647, %v640, %v644
  %v649 = vand.u32 2147483647, %v562
  %vm650 = vcmp.eq.f32.partialorder %v649, 8.507059e+37
  %v651 = vand.u32 %v562, 2147483648
  %v652 = vor.u32 1.1754944e-38, %v651
  %v653 = vsel %vm650, %v652, %v648
  %v654 = vmul.f32 1.0, %v653
  %v655 = vrcp.pop %v563
  %v656 = vmul.f32 %v563, %v655
  %v657 = vsub.f32 1.0, %v656
  %v658 = vmul.f32 %v655, %v657
  %v659 = vadd.f32 %v655, %v658
  %vm660 = vweird.f32 %v563
  %vm661 = vweird.f32 %v655
  %vm662 = vmor %vm660, %vm661
  %v663 = vsel %vm662, %v655, %v659
  %v664 = vand.u32 2147483647, %v563
  %vm665 = vcmp.eq.f32.partialorder %v664, 8.507059e+37
  %v666 = vand.u32 %v563, 2147483648
  %v667 = vor.u32 1.1754944e-38, %v666
  %v668 = vsel %vm665, %v667, %v663
  %v669 = vmul.f32 1.0, %v668
  %v670 = vrcp.pop %v564
  %v671 = vmul.f32 %v564, %v670
  %v672 = vsub.f32 1.0, %v671
  %v673 = vmul.f32 %v670, %v672
  %v674 = vadd.f32 %v670, %v673
  %vm675 = vweird.f32 %v564
  %vm676 = vweird.f32 %v670
  %vm677 = vmor %vm675, %vm676
  %v678 = vsel %vm677, %v670, %v674
  %v679 = vand.u32 2147483647, %v564
  %vm680 = vcmp.eq.f32.partialorder %v679, 8.507059e+37
  %v681 = vand.u32 %v564, 2147483648
  %v682 = vor.u32 1.1754944e-38, %v681
  %v683 = vsel %vm680, %v682, %v678
  %v684 = vmul.f32 1.0, %v683
  %v685 = vtanh.pop %v525
  %v686 = vtanh.pop %v526
  %v687 = vtanh.pop %v527
  %v688 = vtanh.pop %v528
  %v689 = vtanh.pop %v529
  %v690 = vtanh.pop %v530
  %v691 = vtanh.pop %v531
  %v692 = vtanh.pop %v532
  %v701 = vrot.slane %v400, 7
  %v702 = vrot.slane %v401, 7
  %v703 = vrot.slane %v402, 7
  %v704 = vrot.slane %v403, 7
  %v705 = vrot.slane %v404, 7
  %v706 = vrot.slane %v405, 7
  %v707 = vrot.slane %v406, 7
  %v708 = vrot.slane %v407, 7
  %v717 = vmul.f32 %v579, %v701
  %v718 = vmul.f32 %v594, %v702
  %v719 = vmul.f32 %v609, %v703
  %v720 = vmul.f32 %v624, %v704
  %v721 = vmul.f32 %v639, %v705
  %v722 = vmul.f32 %v654, %v706
  %v723 = vmul.f32 %v669, %v707
  %v724 = vmul.f32 %v684, %v708
  %733 = vrot.lane.b32.xlu0 %v685, 64
  %v734 = vpop.permute.xlu0 %733
  %735 = vrot.lane.b32.xlu0 %v686, 64
  %v736 = vpop.permute.xlu0 %735
  %737 = vrot.lane.b32.xlu0 %v687, 64
  %v738 = vpop.permute.xlu0 %737
  %739 = vrot.lane.b32.xlu0 %v688, 64
  %v740 = vpop.permute.xlu0 %739
  %741 = vrot.lane.b32.xlu0 %v689, 64
  %v742 = vpop.permute.xlu0 %741
  %743 = vrot.lane.b32.xlu0 %v690, 64
  %v744 = vpop.permute.xlu0 %743
  %745 = vrot.lane.b32.xlu0 %v691, 64
  %v746 = vpop.permute.xlu0 %745
  %747 = vrot.lane.b32.xlu0 %v692, 64
  %v748 = vpop.permute.xlu0 %747
  %v757 = vmul.f32 %v579, %v734
  %v758 = vmul.f32 %v594, %v736
  %v759 = vmul.f32 %v609, %v738
  %v760 = vmul.f32 %v624, %v740
  %v761 = vmul.f32 %v639, %v742
  %v762 = vmul.f32 %v654, %v744
  %v763 = vmul.f32 %v669, %v746
  %v764 = vmul.f32 %v684, %v748
  %773 = vrot.lane.b32.xlu0 %v757, 32
  %v774 = vpop.permute.xlu0 %773
  %775 = vrot.lane.b32.xlu0 %v758, 32
  %v776 = vpop.permute.xlu0 %775
  %777 = vrot.lane.b32.xlu0 %v759, 32
  %v778 = vpop.permute.xlu0 %777
  %779 = vrot.lane.b32.xlu0 %v760, 32
  %v780 = vpop.permute.xlu0 %779
  %781 = vrot.lane.b32.xlu0 %v761, 32
  %v782 = vpop.permute.xlu0 %781
  %783 = vrot.lane.b32.xlu0 %v762, 32
  %v784 = vpop.permute.xlu0 %783
  %785 = vrot.lane.b32.xlu0 %v763, 32
  %v786 = vpop.permute.xlu0 %785
  %787 = vrot.lane.b32.xlu0 %v764, 32
  %v788 = vpop.permute.xlu0 %787
  %v797 = vadd.f32 %v717, %v774
  %v798 = vadd.f32 %v718, %v776
  %v799 = vadd.f32 %v719, %v778
  %v800 = vadd.f32 %v720, %v780
  %v801 = vadd.f32 %v721, %v782
  %v802 = vadd.f32 %v722, %v784
  %v803 = vadd.f32 %v723, %v786
  %v804 = vadd.f32 %v724, %v788
  %v805 = vtanh.pop %v797
  %v806 = vtanh.pop %v798
  %v807 = vtanh.pop %v799
  %v808 = vtanh.pop %v800
  %v809 = vtanh.pop %v801
  %v810 = vtanh.pop %v802
  %v811 = vtanh.pop %v803
  %v812 = vtanh.pop %v804
  %821 = vrot.lane.b32.xlu0 %v805, 64
  %v822 = vpop.permute.xlu0 %821
  %823 = vrot.lane.b32.xlu0 %v806, 64
  %v824 = vpop.permute.xlu0 %823
  %825 = vrot.lane.b32.xlu0 %v807, 64
  %v826 = vpop.permute.xlu0 %825
  %827 = vrot.lane.b32.xlu0 %v808, 64
  %v828 = vpop.permute.xlu0 %827
  %829 = vrot.lane.b32.xlu0 %v809, 64
  %v830 = vpop.permute.xlu0 %829
  %831 = vrot.lane.b32.xlu0 %v810, 64
  %v832 = vpop.permute.xlu0 %831
  %833 = vrot.lane.b32.xlu0 %v811, 64
  %v834 = vpop.permute.xlu0 %833
  %835 = vrot.lane.b32.xlu0 %v812, 64
  %v836 = vpop.permute.xlu0 %835
  %v845 = vmul.f32 %v579, %v822
  %v846 = vmul.f32 %v594, %v824
  %v847 = vmul.f32 %v609, %v826
  %v848 = vmul.f32 %v624, %v828
  %v849 = vmul.f32 %v639, %v830
  %v850 = vmul.f32 %v654, %v832
  %v851 = vmul.f32 %v669, %v834
  %v852 = vmul.f32 %v684, %v836
  %v861 = vrot.slane %v845, 1
  %v862 = vsel %vm465, %v846, %v861
  %v863 = vrot.slane %v847, 7
  %v864 = vsel %vm468, %v863, %v862
  %v865 = vrot.slane %v848, 6
  %v866 = vsel %vm471, %v865, %v864
  %v867 = vrot.slane %v849, 5
  %v868 = vsel %vm474, %v867, %v866
  %v869 = vrot.slane %v850, 4
  %v870 = vsel %vm477, %v869, %v868
  %v871 = vrot.slane %v851, 3
  %v872 = vsel %vm480, %v871, %v870
  %v873 = vrot.slane %v852, 2
  %v874 = vsel %vm483, %v873, %v872
  %875 = vrot.lane.b32.xlu0 %v874, 32
  %v876 = vpop.permute.xlu0 %875
  %v877 = vsel %vm112, %v876, 0
  %879 = vmatpush.msra.mxu0 0.0
  %880 = vmatpush.msra.mxu0 0.0
  %881 = vmatpush.msra.mxu0 0.0
  %882 = vmatpush.msra.mxu0 0.0
  %883 = vmatpush.msra.mxu0 0.0
  %884 = vmatpush.msra.mxu0 0.0
  %885 = vmatpush.msra.mxu0 0.0
  %886 = vmatpush.msra.mxu0 0.0
  %887 = vmatpush.msra.mxu0 0.0
  %888 = vmatpush.msra.mxu0 0.0
  %889 = vmatpush.msra.mxu0 0.0
  %890 = vmatpush.msra.mxu0 0.0
  %891 = vmatpush.msra.mxu0 %v28
  %892 = vmatpush.msra.mxu0 %v27
  %893 = vmatpush.msra.mxu0 %v26
  %894 = vmatpush.msra.mxu0 %v25
  %895 = vmatmul.f32.gmra.mxu0 %v877
  %v896 = vpop.f32.mrf.mxu0
  %v897 = vadd.f32 0.0, %v896
  %898 = vdwg.mxu0
  %v900 = vrot.slane %v897, 6
  %v901 = vrot.slane %v897, 7
  %v902 = vrot.slane %v897, 1
  %v903 = vrot.slane %v897, 2
  %v904 = vrot.slane %v897, 3
  %v905 = vrot.slane %v897, 4
  %v906 = vrot.slane %v897, 5
  %v915 = vadd.f32 %v89, %v900
  %v916 = vadd.f32 %v92, %v901
  %v917 = vadd.f32 %v95, %v897
  %v918 = vadd.f32 %v98, %v902
  %v919 = vadd.f32 %v101, %v903
  %v920 = vadd.f32 %v104, %v904
  %v921 = vadd.f32 %v107, %v905
  %v922 = vadd.f32 %v110, %v906
  %v923 = vxor.u32 %v915, 2147483648
  %v924 = vxor.u32 %v916, 2147483648
  %v925 = vxor.u32 %v917, 2147483648
  %v926 = vxor.u32 %v918, 2147483648
  %v927 = vxor.u32 %v919, 2147483648
  %v928 = vxor.u32 %v920, 2147483648
  %v929 = vxor.u32 %v921, 2147483648
  %v930 = vxor.u32 %v922, 2147483648
  %v931 = vmul.f32 %v923, 1.442695
  %v932 = vpow.pop %v931
  %v933 = vmul.f32 %v924, 1.442695
  %v934 = vpow.pop %v933
  %v935 = vmul.f32 %v925, 1.442695
  %v936 = vpow.pop %v935
  %v937 = vmul.f32 %v926, 1.442695
  %v938 = vpow.pop %v937
  %v939 = vmul.f32 %v927, 1.442695
  %v940 = vpow.pop %v939
  %v941 = vmul.f32 %v928, 1.442695
  %v942 = vpow.pop %v941
  %v943 = vmul.f32 %v929, 1.442695
  %v944 = vpow.pop %v943
  %v945 = vmul.f32 %v930, 1.442695
  %v946 = vpow.pop %v945
  %v947 = vadd.f32 %v932, 1.0
  %v948 = vadd.f32 %v934, 1.0
  %v949 = vadd.f32 %v936, 1.0
  %v950 = vadd.f32 %v938, 1.0
  %v951 = vadd.f32 %v940, 1.0
  %v952 = vadd.f32 %v942, 1.0
  %v953 = vadd.f32 %v944, 1.0
  %v954 = vadd.f32 %v946, 1.0
  %v955 = vrcp.pop %v947
  %v956 = vmul.f32 %v947, %v955
  %v957 = vsub.f32 1.0, %v956
  %v958 = vmul.f32 %v955, %v957
  %v959 = vadd.f32 %v955, %v958
  %vm960 = vweird.f32 %v947
  %vm961 = vweird.f32 %v955
  %vm962 = vmor %vm960, %vm961
  %v963 = vsel %vm962, %v955, %v959
  %v964 = vand.u32 2147483647, %v947
  %vm965 = vcmp.eq.f32.partialorder %v964, 8.507059e+37
  %v966 = vand.u32 %v947, 2147483648
  %v967 = vor.u32 1.1754944e-38, %v966
  %v968 = vsel %vm965, %v967, %v963
  %v969 = vmul.f32 1.0, %v968
  %v970 = vrcp.pop %v948
  %v971 = vmul.f32 %v948, %v970
  %v972 = vsub.f32 1.0, %v971
  %v973 = vmul.f32 %v970, %v972
  %v974 = vadd.f32 %v970, %v973
  %vm975 = vweird.f32 %v948
  %vm976 = vweird.f32 %v970
  %vm977 = vmor %vm975, %vm976
  %v978 = vsel %vm977, %v970, %v974
  %v979 = vand.u32 2147483647, %v948
  %vm980 = vcmp.eq.f32.partialorder %v979, 8.507059e+37
  %v981 = vand.u32 %v948, 2147483648
  %v982 = vor.u32 1.1754944e-38, %v981
  %v983 = vsel %vm980, %v982, %v978
  %v984 = vmul.f32 1.0, %v983
  %v985 = vrcp.pop %v949
  %v986 = vmul.f32 %v949, %v985
  %v987 = vsub.f32 1.0, %v986
  %v988 = vmul.f32 %v985, %v987
  %v989 = vadd.f32 %v985, %v988
  %vm990 = vweird.f32 %v949
  %vm991 = vweird.f32 %v985
  %vm992 = vmor %vm990, %vm991
  %v993 = vsel %vm992, %v985, %v989
  %v994 = vand.u32 2147483647, %v949
  %vm995 = vcmp.eq.f32.partialorder %v994, 8.507059e+37
  %v996 = vand.u32 %v949, 2147483648
  %v997 = vor.u32 1.1754944e-38, %v996
  %v998 = vsel %vm995, %v997, %v993
  %v999 = vmul.f32 1.0, %v998
  %v1000 = vrcp.pop %v950
  %v1001 = vmul.f32 %v950, %v1000
  %v1002 = vsub.f32 1.0, %v1001
  %v1003 = vmul.f32 %v1000, %v1002
  %v1004 = vadd.f32 %v1000, %v1003
  %vm1005 = vweird.f32 %v950
  %vm1006 = vweird.f32 %v1000
  %vm1007 = vmor %vm1005, %vm1006
  %v1008 = vsel %vm1007, %v1000, %v1004
  %v1009 = vand.u32 2147483647, %v950
  %vm1010 = vcmp.eq.f32.partialorder %v1009, 8.507059e+37
  %v1011 = vand.u32 %v950, 2147483648
  %v1012 = vor.u32 1.1754944e-38, %v1011
  %v1013 = vsel %vm1010, %v1012, %v1008
  %v1014 = vmul.f32 1.0, %v1013
  %v1015 = vrcp.pop %v951
  %v1016 = vmul.f32 %v951, %v1015
  %v1017 = vsub.f32 1.0, %v1016
  %v1018 = vmul.f32 %v1015, %v1017
  %v1019 = vadd.f32 %v1015, %v1018
  %vm1020 = vweird.f32 %v951
  %vm1021 = vweird.f32 %v1015
  %vm1022 = vmor %vm1020, %vm1021
  %v1023 = vsel %vm1022, %v1015, %v1019
  %v1024 = vand.u32 2147483647, %v951
  %vm1025 = vcmp.eq.f32.partialorder %v1024, 8.507059e+37
  %v1026 = vand.u32 %v951, 2147483648
  %v1027 = vor.u32 1.1754944e-38, %v1026
  %v1028 = vsel %vm1025, %v1027, %v1023
  %v1029 = vmul.f32 1.0, %v1028
  %v1030 = vrcp.pop %v952
  %v1031 = vmul.f32 %v952, %v1030
  %v1032 = vsub.f32 1.0, %v1031
  %v1033 = vmul.f32 %v1030, %v1032
  %v1034 = vadd.f32 %v1030, %v1033
  %vm1035 = vweird.f32 %v952
  %vm1036 = vweird.f32 %v1030
  %vm1037 = vmor %vm1035, %vm1036
  %v1038 = vsel %vm1037, %v1030, %v1034
  %v1039 = vand.u32 2147483647, %v952
  %vm1040 = vcmp.eq.f32.partialorder %v1039, 8.507059e+37
  %v1041 = vand.u32 %v952, 2147483648
  %v1042 = vor.u32 1.1754944e-38, %v1041
  %v1043 = vsel %vm1040, %v1042, %v1038
  %v1044 = vmul.f32 1.0, %v1043
  %v1045 = vrcp.pop %v953
  %v1046 = vmul.f32 %v953, %v1045
  %v1047 = vsub.f32 1.0, %v1046
  %v1048 = vmul.f32 %v1045, %v1047
  %v1049 = vadd.f32 %v1045, %v1048
  %vm1050 = vweird.f32 %v953
  %vm1051 = vweird.f32 %v1045
  %vm1052 = vmor %vm1050, %vm1051
  %v1053 = vsel %vm1052, %v1045, %v1049
  %v1054 = vand.u32 2147483647, %v953
  %vm1055 = vcmp.eq.f32.partialorder %v1054, 8.507059e+37
  %v1056 = vand.u32 %v953, 2147483648
  %v1057 = vor.u32 1.1754944e-38, %v1056
  %v1058 = vsel %vm1055, %v1057, %v1053
  %v1059 = vmul.f32 1.0, %v1058
  %v1060 = vrcp.pop %v954
  %v1061 = vmul.f32 %v954, %v1060
  %v1062 = vsub.f32 1.0, %v1061
  %v1063 = vmul.f32 %v1060, %v1062
  %v1064 = vadd.f32 %v1060, %v1063
  %vm1065 = vweird.f32 %v954
  %vm1066 = vweird.f32 %v1060
  %vm1067 = vmor %vm1065, %vm1066
  %v1068 = vsel %vm1067, %v1060, %v1064
  %v1069 = vand.u32 2147483647, %v954
  %vm1070 = vcmp.eq.f32.partialorder %v1069, 8.507059e+37
  %v1071 = vand.u32 %v954, 2147483648
  %v1072 = vor.u32 1.1754944e-38, %v1071
  %v1073 = vsel %vm1070, %v1072, %v1068
  %v1074 = vmul.f32 1.0, %v1073
  %v1075 = vtanh.pop %v915
  %v1076 = vtanh.pop %v916
  %v1077 = vtanh.pop %v917
  %v1078 = vtanh.pop %v918
  %v1079 = vtanh.pop %v919
  %v1080 = vtanh.pop %v920
  %v1081 = vtanh.pop %v921
  %v1082 = vtanh.pop %v922
  %v1091 = vrot.slane %v797, 7
  %v1092 = vrot.slane %v798, 7
  %v1093 = vrot.slane %v799, 7
  %v1094 = vrot.slane %v800, 7
  %v1095 = vrot.slane %v801, 7
  %v1096 = vrot.slane %v802, 7
  %v1097 = vrot.slane %v803, 7
  %v1098 = vrot.slane %v804, 7
  %v1107 = vmul.f32 %v969, %v1091
  %v1108 = vmul.f32 %v984, %v1092
  %v1109 = vmul.f32 %v999, %v1093
  %v1110 = vmul.f32 %v1014, %v1094
  %v1111 = vmul.f32 %v1029, %v1095
  %v1112 = vmul.f32 %v1044, %v1096
  %v1113 = vmul.f32 %v1059, %v1097
  %v1114 = vmul.f32 %v1074, %v1098
  %1123 = vrot.lane.b32.xlu0 %v1075, 64
  %v1124 = vpop.permute.xlu0 %1123
  %1125 = vrot.lane.b32.xlu0 %v1076, 64
  %v1126 = vpop.permute.xlu0 %1125
  %1127 = vrot.lane.b32.xlu0 %v1077, 64
  %v1128 = vpop.permute.xlu0 %1127
  %1129 = vrot.lane.b32.xlu0 %v1078, 64
  %v1130 = vpop.permute.xlu0 %1129
  %1131 = vrot.lane.b32.xlu0 %v1079, 64
  %v1132 = vpop.permute.xlu0 %1131
  %1133 = vrot.lane.b32.xlu0 %v1080, 64
  %v1134 = vpop.permute.xlu0 %1133
  %1135 = vrot.lane.b32.xlu0 %v1081, 64
  %v1136 = vpop.permute.xlu0 %1135
  %1137 = vrot.lane.b32.xlu0 %v1082, 64
  %v1138 = vpop.permute.xlu0 %1137
  %v1147 = vmul.f32 %v969, %v1124
  %v1148 = vmul.f32 %v984, %v1126
  %v1149 = vmul.f32 %v999, %v1128
  %v1150 = vmul.f32 %v1014, %v1130
  %v1151 = vmul.f32 %v1029, %v1132
  %v1152 = vmul.f32 %v1044, %v1134
  %v1153 = vmul.f32 %v1059, %v1136
  %v1154 = vmul.f32 %v1074, %v1138
  %1163 = vrot.lane.b32.xlu0 %v1147, 32
  %v1164 = vpop.permute.xlu0 %1163
  %1165 = vrot.lane.b32.xlu0 %v1148, 32
  %v1166 = vpop.permute.xlu0 %1165
  %1167 = vrot.lane.b32.xlu0 %v1149, 32
  %v1168 = vpop.permute.xlu0 %1167
  %1169 = vrot.lane.b32.xlu0 %v1150, 32
  %v1170 = vpop.permute.xlu0 %1169
  %1171 = vrot.lane.b32.xlu0 %v1151, 32
  %v1172 = vpop.permute.xlu0 %1171
  %1173 = vrot.lane.b32.xlu0 %v1152, 32
  %v1174 = vpop.permute.xlu0 %1173
  %1175 = vrot.lane.b32.xlu0 %v1153, 32
  %v1176 = vpop.permute.xlu0 %1175
  %1177 = vrot.lane.b32.xlu0 %v1154, 32
  %v1178 = vpop.permute.xlu0 %1177
  %v1187 = vadd.f32 %v1107, %v1164
  %v1188 = vadd.f32 %v1108, %v1166
  %v1189 = vadd.f32 %v1109, %v1168
  %v1190 = vadd.f32 %v1110, %v1170
  %v1191 = vadd.f32 %v1111, %v1172
  %v1192 = vadd.f32 %v1112, %v1174
  %v1193 = vadd.f32 %v1113, %v1176
  %v1194 = vadd.f32 %v1114, %v1178
  %v1195 = vtanh.pop %v1187
  %v1196 = vtanh.pop %v1188
  %v1197 = vtanh.pop %v1189
  %v1198 = vtanh.pop %v1190
  %v1199 = vtanh.pop %v1191
  %v1200 = vtanh.pop %v1192
  %v1201 = vtanh.pop %v1193
  %v1202 = vtanh.pop %v1194
  %1211 = vrot.lane.b32.xlu0 %v1195, 64
  %v1212 = vpop.permute.xlu0 %1211
  %1213 = vrot.lane.b32.xlu0 %v1196, 64
  %v1214 = vpop.permute.xlu0 %1213
  %1215 = vrot.lane.b32.xlu0 %v1197, 64
  %v1216 = vpop.permute.xlu0 %1215
  %1217 = vrot.lane.b32.xlu0 %v1198, 64
  %v1218 = vpop.permute.xlu0 %1217
  %1219 = vrot.lane.b32.xlu0 %v1199, 64
  %v1220 = vpop.permute.xlu0 %1219
  %1221 = vrot.lane.b32.xlu0 %v1200, 64
  %v1222 = vpop.permute.xlu0 %1221
  %1223 = vrot.lane.b32.xlu0 %v1201, 64
  %v1224 = vpop.permute.xlu0 %1223
  %1225 = vrot.lane.b32.xlu0 %v1202, 64
  %v1226 = vpop.permute.xlu0 %1225
  %v1235 = vmul.f32 %v969, %v1212
  %v1236 = vmul.f32 %v984, %v1214
  %v1237 = vmul.f32 %v999, %v1216
  %v1238 = vmul.f32 %v1014, %v1218
  %v1239 = vmul.f32 %v1029, %v1220
  %v1240 = vmul.f32 %v1044, %v1222
  %v1241 = vmul.f32 %v1059, %v1224
  %v1242 = vmul.f32 %v1074, %v1226
  %v1251 = vrot.slane %v1235, 2
  %v1252 = vrot.slane %v1236, 1
  %v1253 = vsel %vm465, %v1252, %v1251
  %v1254 = vsel %vm468, %v1237, %v1253
  %v1255 = vrot.slane %v1238, 7
  %v1256 = vsel %vm471, %v1255, %v1254
  %v1257 = vrot.slane %v1239, 6
  %v1258 = vsel %vm474, %v1257, %v1256
  %v1259 = vrot.slane %v1240, 5
  %v1260 = vsel %vm477, %v1259, %v1258
  %v1261 = vrot.slane %v1241, 4
  %v1262 = vsel %vm480, %v1261, %v1260
  %v1263 = vrot.slane %v1242, 3
  %v1264 = vsel %vm483, %v1263, %v1262
  %1265 = vrot.lane.b32.xlu0 %v1264, 32
  %v1266 = vpop.permute.xlu0 %1265
  %v1267 = vsel %vm112, %v1266, 0
  %1269 = vmatpush.msra.mxu0 0.0
  %1270 = vmatpush.msra.mxu0 0.0
  %1271 = vmatpush.msra.mxu0 0.0
  %1272 = vmatpush.msra.mxu0 0.0
  %1273 = vmatpush.msra.mxu0 0.0
  %1274 = vmatpush.msra.mxu0 0.0
  %1275 = vmatpush.msra.mxu0 0.0
  %1276 = vmatpush.msra.mxu0 0.0
  %1277 = vmatpush.msra.mxu0 0.0
  %1278 = vmatpush.msra.mxu0 0.0
  %1279 = vmatpush.msra.mxu0 0.0
  %1280 = vmatpush.msra.mxu0 0.0
  %1281 = vmatpush.msra.mxu0 %v28
  %1282 = vmatpush.msra.mxu0 %v27
  %1283 = vmatpush.msra.mxu0 %v26
  %1284 = vmatpush.msra.mxu0 %v25
  %1285 = vmatmul.f32.gmra.mxu0 %v1267
  %v1286 = vpop.f32.mrf.mxu0
  %v1287 = vadd.f32 0.0, %v1286
  %1288 = vdwg.mxu0
  %v1290 = vrot.slane %v1287, 5
  %v1291 = vrot.slane %v1287, 6
  %v1292 = vrot.slane %v1287, 7
  %v1293 = vrot.slane %v1287, 1
  %v1294 = vrot.slane %v1287, 2
  %v1295 = vrot.slane %v1287, 3
  %v1296 = vrot.slane %v1287, 4
  %v1305 = vadd.f32 %v89, %v1290
  %v1306 = vadd.f32 %v92, %v1291
  %v1307 = vadd.f32 %v95, %v1292
  %v1308 = vadd.f32 %v98, %v1287
  %v1309 = vadd.f32 %v101, %v1293
  %v1310 = vadd.f32 %v104, %v1294
  %v1311 = vadd.f32 %v107, %v1295
  %v1312 = vadd.f32 %v110, %v1296
  %v1313 = vxor.u32 %v1305, 2147483648
  %v1314 = vxor.u32 %v1306, 2147483648
  %v1315 = vxor.u32 %v1307, 2147483648
  %v1316 = vxor.u32 %v1308, 2147483648
  %v1317 = vxor.u32 %v1309, 2147483648
  %v1318 = vxor.u32 %v1310, 2147483648
  %v1319 = vxor.u32 %v1311, 2147483648
  %v1320 = vxor.u32 %v1312, 2147483648
  %v1321 = vmul.f32 %v1313, 1.442695
  %v1322 = vpow.pop %v1321
  %v1323 = vmul.f32 %v1314, 1.442695
  %v1324 = vpow.pop %v1323
  %v1325 = vmul.f32 %v1315, 1.442695
  %v1326 = vpow.pop %v1325
  %v1327 = vmul.f32 %v1316, 1.442695
  %v1328 = vpow.pop %v1327
  %v1329 = vmul.f32 %v1317, 1.442695
  %v1330 = vpow.pop %v1329
  %v1331 = vmul.f32 %v1318, 1.442695
  %v1332 = vpow.pop %v1331
  %v1333 = vmul.f32 %v1319, 1.442695
  %v1334 = vpow.pop %v1333
  %v1335 = vmul.f32 %v1320, 1.442695
  %v1336 = vpow.pop %v1335
  %v1337 = vadd.f32 %v1322, 1.0
  %v1338 = vadd.f32 %v1324, 1.0
  %v1339 = vadd.f32 %v1326, 1.0
  %v1340 = vadd.f32 %v1328, 1.0
  %v1341 = vadd.f32 %v1330, 1.0
  %v1342 = vadd.f32 %v1332, 1.0
  %v1343 = vadd.f32 %v1334, 1.0
  %v1344 = vadd.f32 %v1336, 1.0
  %v1345 = vrcp.pop %v1337
  %v1346 = vmul.f32 %v1337, %v1345
  %v1347 = vsub.f32 1.0, %v1346
  %v1348 = vmul.f32 %v1345, %v1347
  %v1349 = vadd.f32 %v1345, %v1348
  %vm1350 = vweird.f32 %v1337
  %vm1351 = vweird.f32 %v1345
  %vm1352 = vmor %vm1350, %vm1351
  %v1353 = vsel %vm1352, %v1345, %v1349
  %v1354 = vand.u32 2147483647, %v1337
  %vm1355 = vcmp.eq.f32.partialorder %v1354, 8.507059e+37
  %v1356 = vand.u32 %v1337, 2147483648
  %v1357 = vor.u32 1.1754944e-38, %v1356
  %v1358 = vsel %vm1355, %v1357, %v1353
  %v1359 = vmul.f32 1.0, %v1358
  %v1360 = vrcp.pop %v1338
  %v1361 = vmul.f32 %v1338, %v1360
  %v1362 = vsub.f32 1.0, %v1361
  %v1363 = vmul.f32 %v1360, %v1362
  %v1364 = vadd.f32 %v1360, %v1363
  %vm1365 = vweird.f32 %v1338
  %vm1366 = vweird.f32 %v1360
  %vm1367 = vmor %vm1365, %vm1366
  %v1368 = vsel %vm1367, %v1360, %v1364
  %v1369 = vand.u32 2147483647, %v1338
  %vm1370 = vcmp.eq.f32.partialorder %v1369, 8.507059e+37
  %v1371 = vand.u32 %v1338, 2147483648
  %v1372 = vor.u32 1.1754944e-38, %v1371
  %v1373 = vsel %vm1370, %v1372, %v1368
  %v1374 = vmul.f32 1.0, %v1373
  %v1375 = vrcp.pop %v1339
  %v1376 = vmul.f32 %v1339, %v1375
  %v1377 = vsub.f32 1.0, %v1376
  %v1378 = vmul.f32 %v1375, %v1377
  %v1379 = vadd.f32 %v1375, %v1378
  %vm1380 = vweird.f32 %v1339
  %vm1381 = vweird.f32 %v1375
  %vm1382 = vmor %vm1380, %vm1381
  %v1383 = vsel %vm1382, %v1375, %v1379
  %v1384 = vand.u32 2147483647, %v1339
  %vm1385 = vcmp.eq.f32.partialorder %v1384, 8.507059e+37
  %v1386 = vand.u32 %v1339, 2147483648
  %v1387 = vor.u32 1.1754944e-38, %v1386
  %v1388 = vsel %vm1385, %v1387, %v1383
  %v1389 = vmul.f32 1.0, %v1388
  %v1390 = vrcp.pop %v1340
  %v1391 = vmul.f32 %v1340, %v1390
  %v1392 = vsub.f32 1.0, %v1391
  %v1393 = vmul.f32 %v1390, %v1392
  %v1394 = vadd.f32 %v1390, %v1393
  %vm1395 = vweird.f32 %v1340
  %vm1396 = vweird.f32 %v1390
  %vm1397 = vmor %vm1395, %vm1396
  %v1398 = vsel %vm1397, %v1390, %v1394
  %v1399 = vand.u32 2147483647, %v1340
  %vm1400 = vcmp.eq.f32.partialorder %v1399, 8.507059e+37
  %v1401 = vand.u32 %v1340, 2147483648
  %v1402 = vor.u32 1.1754944e-38, %v1401
  %v1403 = vsel %vm1400, %v1402, %v1398
  %v1404 = vmul.f32 1.0, %v1403
  %v1405 = vrcp.pop %v1341
  %v1406 = vmul.f32 %v1341, %v1405
  %v1407 = vsub.f32 1.0, %v1406
  %v1408 = vmul.f32 %v1405, %v1407
  %v1409 = vadd.f32 %v1405, %v1408
  %vm1410 = vweird.f32 %v1341
  %vm1411 = vweird.f32 %v1405
  %vm1412 = vmor %vm1410, %vm1411
  %v1413 = vsel %vm1412, %v1405, %v1409
  %v1414 = vand.u32 2147483647, %v1341
  %vm1415 = vcmp.eq.f32.partialorder %v1414, 8.507059e+37
  %v1416 = vand.u32 %v1341, 2147483648
  %v1417 = vor.u32 1.1754944e-38, %v1416
  %v1418 = vsel %vm1415, %v1417, %v1413
  %v1419 = vmul.f32 1.0, %v1418
  %v1420 = vrcp.pop %v1342
  %v1421 = vmul.f32 %v1342, %v1420
  %v1422 = vsub.f32 1.0, %v1421
  %v1423 = vmul.f32 %v1420, %v1422
  %v1424 = vadd.f32 %v1420, %v1423
  %vm1425 = vweird.f32 %v1342
  %vm1426 = vweird.f32 %v1420
  %vm1427 = vmor %vm1425, %vm1426
  %v1428 = vsel %vm1427, %v1420, %v1424
  %v1429 = vand.u32 2147483647, %v1342
  %vm1430 = vcmp.eq.f32.partialorder %v1429, 8.507059e+37
  %v1431 = vand.u32 %v1342, 2147483648
  %v1432 = vor.u32 1.1754944e-38, %v1431
  %v1433 = vsel %vm1430, %v1432, %v1428
  %v1434 = vmul.f32 1.0, %v1433
  %v1435 = vrcp.pop %v1343
  %v1436 = vmul.f32 %v1343, %v1435
  %v1437 = vsub.f32 1.0, %v1436
  %v1438 = vmul.f32 %v1435, %v1437
  %v1439 = vadd.f32 %v1435, %v1438
  %vm1440 = vweird.f32 %v1343
  %vm1441 = vweird.f32 %v1435
  %vm1442 = vmor %vm1440, %vm1441
  %v1443 = vsel %vm1442, %v1435, %v1439
  %v1444 = vand.u32 2147483647, %v1343
  %vm1445 = vcmp.eq.f32.partialorder %v1444, 8.507059e+37
  %v1446 = vand.u32 %v1343, 2147483648
  %v1447 = vor.u32 1.1754944e-38, %v1446
  %v1448 = vsel %vm1445, %v1447, %v1443
  %v1449 = vmul.f32 1.0, %v1448
  %v1450 = vrcp.pop %v1344
  %v1451 = vmul.f32 %v1344, %v1450
  %v1452 = vsub.f32 1.0, %v1451
  %v1453 = vmul.f32 %v1450, %v1452
  %v1454 = vadd.f32 %v1450, %v1453
  %vm1455 = vweird.f32 %v1344
  %vm1456 = vweird.f32 %v1450
  %vm1457 = vmor %vm1455, %vm1456
  %v1458 = vsel %vm1457, %v1450, %v1454
  %v1459 = vand.u32 2147483647, %v1344
  %vm1460 = vcmp.eq.f32.partialorder %v1459, 8.507059e+37
  %v1461 = vand.u32 %v1344, 2147483648
  %v1462 = vor.u32 1.1754944e-38, %v1461
  %v1463 = vsel %vm1460, %v1462, %v1458
  %v1464 = vmul.f32 1.0, %v1463
  %v1465 = vtanh.pop %v1305
  %v1466 = vtanh.pop %v1306
  %v1467 = vtanh.pop %v1307
  %v1468 = vtanh.pop %v1308
  %v1469 = vtanh.pop %v1309
  %v1470 = vtanh.pop %v1310
  %v1471 = vtanh.pop %v1311
  %v1472 = vtanh.pop %v1312
  %v1481 = vrot.slane %v1187, 7
  %v1482 = vrot.slane %v1188, 7
  %v1483 = vrot.slane %v1189, 7
  %v1484 = vrot.slane %v1190, 7
  %v1485 = vrot.slane %v1191, 7
  %v1486 = vrot.slane %v1192, 7
  %v1487 = vrot.slane %v1193, 7
  %v1488 = vrot.slane %v1194, 7
  %v1497 = vmul.f32 %v1359, %v1481
  %v1498 = vmul.f32 %v1374, %v1482
  %v1499 = vmul.f32 %v1389, %v1483
  %v1500 = vmul.f32 %v1404, %v1484
  %v1501 = vmul.f32 %v1419, %v1485
  %v1502 = vmul.f32 %v1434, %v1486
  %v1503 = vmul.f32 %v1449, %v1487
  %v1504 = vmul.f32 %v1464, %v1488
  %1513 = vrot.lane.b32.xlu0 %v1465, 64
  %v1514 = vpop.permute.xlu0 %1513
  %1515 = vrot.lane.b32.xlu0 %v1466, 64
  %v1516 = vpop.permute.xlu0 %1515
  %1517 = vrot.lane.b32.xlu0 %v1467, 64
  %v1518 = vpop.permute.xlu0 %1517
  %1519 = vrot.lane.b32.xlu0 %v1468, 64
  %v1520 = vpop.permute.xlu0 %1519
  %1521 = vrot.lane.b32.xlu0 %v1469, 64
  %v1522 = vpop.permute.xlu0 %1521
  %1523 = vrot.lane.b32.xlu0 %v1470, 64
  %v1524 = vpop.permute.xlu0 %1523
  %1525 = vrot.lane.b32.xlu0 %v1471, 64
  %v1526 = vpop.permute.xlu0 %1525
  %1527 = vrot.lane.b32.xlu0 %v1472, 64
  %v1528 = vpop.permute.xlu0 %1527
  %v1537 = vmul.f32 %v1359, %v1514
  %v1538 = vmul.f32 %v1374, %v1516
  %v1539 = vmul.f32 %v1389, %v1518
  %v1540 = vmul.f32 %v1404, %v1520
  %v1541 = vmul.f32 %v1419, %v1522
  %v1542 = vmul.f32 %v1434, %v1524
  %v1543 = vmul.f32 %v1449, %v1526
  %v1544 = vmul.f32 %v1464, %v1528
  %1553 = vrot.lane.b32.xlu0 %v1537, 32
  %v1554 = vpop.permute.xlu0 %1553
  %1555 = vrot.lane.b32.xlu0 %v1538, 32
  %v1556 = vpop.permute.xlu0 %1555
  %1557 = vrot.lane.b32.xlu0 %v1539, 32
  %v1558 = vpop.permute.xlu0 %1557
  %1559 = vrot.lane.b32.xlu0 %v1540, 32
  %v1560 = vpop.permute.xlu0 %1559
  %1561 = vrot.lane.b32.xlu0 %v1541, 32
  %v1562 = vpop.permute.xlu0 %1561
  %1563 = vrot.lane.b32.xlu0 %v1542, 32
  %v1564 = vpop.permute.xlu0 %1563
  %1565 = vrot.lane.b32.xlu0 %v1543, 32
  %v1566 = vpop.permute.xlu0 %1565
  %1567 = vrot.lane.b32.xlu0 %v1544, 32
  %v1568 = vpop.permute.xlu0 %1567
  %v1577 = vadd.f32 %v1497, %v1554
  %v1578 = vadd.f32 %v1498, %v1556
  %v1579 = vadd.f32 %v1499, %v1558
  %v1580 = vadd.f32 %v1500, %v1560
  %v1581 = vadd.f32 %v1501, %v1562
  %v1582 = vadd.f32 %v1502, %v1564
  %v1583 = vadd.f32 %v1503, %v1566
  %v1584 = vadd.f32 %v1504, %v1568
  %v1585 = vtanh.pop %v1577
  %v1586 = vtanh.pop %v1578
  %v1587 = vtanh.pop %v1579
  %v1588 = vtanh.pop %v1580
  %v1589 = vtanh.pop %v1581
  %v1590 = vtanh.pop %v1582
  %v1591 = vtanh.pop %v1583
  %v1592 = vtanh.pop %v1584
  %1601 = vrot.lane.b32.xlu0 %v1585, 64
  %v1602 = vpop.permute.xlu0 %1601
  %1603 = vrot.lane.b32.xlu0 %v1586, 64
  %v1604 = vpop.permute.xlu0 %1603
  %1605 = vrot.lane.b32.xlu0 %v1587, 64
  %v1606 = vpop.permute.xlu0 %1605
  %1607 = vrot.lane.b32.xlu0 %v1588, 64
  %v1608 = vpop.permute.xlu0 %1607
  %1609 = vrot.lane.b32.xlu0 %v1589, 64
  %v1610 = vpop.permute.xlu0 %1609
  %1611 = vrot.lane.b32.xlu0 %v1590, 64
  %v1612 = vpop.permute.xlu0 %1611
  %1613 = vrot.lane.b32.xlu0 %v1591, 64
  %v1614 = vpop.permute.xlu0 %1613
  %1615 = vrot.lane.b32.xlu0 %v1592, 64
  %v1616 = vpop.permute.xlu0 %1615
  %v1625 = vmul.f32 %v1359, %v1602
  %v1626 = vmul.f32 %v1374, %v1604
  %v1627 = vmul.f32 %v1389, %v1606
  %v1628 = vmul.f32 %v1404, %v1608
  %v1629 = vmul.f32 %v1419, %v1610
  %v1630 = vmul.f32 %v1434, %v1612
  %v1631 = vmul.f32 %v1449, %v1614
  %v1632 = vmul.f32 %v1464, %v1616
  %v1641 = vrot.slane %v1625, 3
  %v1642 = vrot.slane %v1626, 2
  %v1643 = vsel %vm465, %v1642, %v1641
  %v1644 = vrot.slane %v1627, 1
  %v1645 = vsel %vm468, %v1644, %v1643
  %v1646 = vsel %vm471, %v1628, %v1645
  %v1647 = vrot.slane %v1629, 7
  %v1648 = vsel %vm474, %v1647, %v1646
  %v1649 = vrot.slane %v1630, 6
  %v1650 = vsel %vm477, %v1649, %v1648
  %v1651 = vrot.slane %v1631, 5
  %v1652 = vsel %vm480, %v1651, %v1650
  %v1653 = vrot.slane %v1632, 4
  %v1654 = vsel %vm483, %v1653, %v1652
  %1655 = vrot.lane.b32.xlu0 %v1654, 32
  %v1656 = vpop.permute.xlu0 %1655
  %v1657 = vsel %vm112, %v1656, 0
  %1659 = vmatpush.msra.mxu0 0.0
  %1660 = vmatpush.msra.mxu0 0.0
  %1661 = vmatpush.msra.mxu0 0.0
  %1662 = vmatpush.msra.mxu0 0.0
  %1663 = vmatpush.msra.mxu0 0.0
  %1664 = vmatpush.msra.mxu0 0.0
  %1665 = vmatpush.msra.mxu0 0.0
  %1666 = vmatpush.msra.mxu0 0.0
  %1667 = vmatpush.msra.mxu0 0.0
  %1668 = vmatpush.msra.mxu0 0.0
  %1669 = vmatpush.msra.mxu0 0.0
  %1670 = vmatpush.msra.mxu0 0.0
  %1671 = vmatpush.msra.mxu0 %v28
  %1672 = vmatpush.msra.mxu0 %v27
  %1673 = vmatpush.msra.mxu0 %v26
  %1674 = vmatpush.msra.mxu0 %v25
  %1675 = vmatmul.f32.gmra.mxu0 %v1657
  %v1676 = vpop.f32.mrf.mxu0
  %v1677 = vadd.f32 0.0, %v1676
  %1678 = vdwg.mxu0
  %v1680 = vrot.slane %v1677, 4
  %v1681 = vrot.slane %v1677, 5
  %v1682 = vrot.slane %v1677, 6
  %v1683 = vrot.slane %v1677, 7
  %v1684 = vrot.slane %v1677, 1
  %v1685 = vrot.slane %v1677, 2
  %v1686 = vrot.slane %v1677, 3
  %v1695 = vadd.f32 %v89, %v1680
  %v1696 = vadd.f32 %v92, %v1681
  %v1697 = vadd.f32 %v95, %v1682
  %v1698 = vadd.f32 %v98, %v1683
  %v1699 = vadd.f32 %v101, %v1677
  %v1700 = vadd.f32 %v104, %v1684
  %v1701 = vadd.f32 %v107, %v1685
  %v1702 = vadd.f32 %v110, %v1686
  %v1703 = vxor.u32 %v1695, 2147483648
  %v1704 = vxor.u32 %v1696, 2147483648
  %v1705 = vxor.u32 %v1697, 2147483648
  %v1706 = vxor.u32 %v1698, 2147483648
  %v1707 = vxor.u32 %v1699, 2147483648
  %v1708 = vxor.u32 %v1700, 2147483648
  %v1709 = vxor.u32 %v1701, 2147483648
  %v1710 = vxor.u32 %v1702, 2147483648
  %v1711 = vmul.f32 %v1703, 1.442695
  %v1712 = vpow.pop %v1711
  %v1713 = vmul.f32 %v1704, 1.442695
  %v1714 = vpow.pop %v1713
  %v1715 = vmul.f32 %v1705, 1.442695
  %v1716 = vpow.pop %v1715
  %v1717 = vmul.f32 %v1706, 1.442695
  %v1718 = vpow.pop %v1717
  %v1719 = vmul.f32 %v1707, 1.442695
  %v1720 = vpow.pop %v1719
  %v1721 = vmul.f32 %v1708, 1.442695
  %v1722 = vpow.pop %v1721
  %v1723 = vmul.f32 %v1709, 1.442695
  %v1724 = vpow.pop %v1723
  %v1725 = vmul.f32 %v1710, 1.442695
  %v1726 = vpow.pop %v1725
  %v1727 = vadd.f32 %v1712, 1.0
  %v1728 = vadd.f32 %v1714, 1.0
  %v1729 = vadd.f32 %v1716, 1.0
  %v1730 = vadd.f32 %v1718, 1.0
  %v1731 = vadd.f32 %v1720, 1.0
  %v1732 = vadd.f32 %v1722, 1.0
  %v1733 = vadd.f32 %v1724, 1.0
  %v1734 = vadd.f32 %v1726, 1.0
  %v1735 = vrcp.pop %v1727
  %v1736 = vmul.f32 %v1727, %v1735
  %v1737 = vsub.f32 1.0, %v1736
  %v1738 = vmul.f32 %v1735, %v1737
  %v1739 = vadd.f32 %v1735, %v1738
  %vm1740 = vweird.f32 %v1727
  %vm1741 = vweird.f32 %v1735
  %vm1742 = vmor %vm1740, %vm1741
  %v1743 = vsel %vm1742, %v1735, %v1739
  %v1744 = vand.u32 2147483647, %v1727
  %vm1745 = vcmp.eq.f32.partialorder %v1744, 8.507059e+37
  %v1746 = vand.u32 %v1727, 2147483648
  %v1747 = vor.u32 1.1754944e-38, %v1746
  %v1748 = vsel %vm1745, %v1747, %v1743
  %v1749 = vmul.f32 1.0, %v1748
  %v1750 = vrcp.pop %v1728
  %v1751 = vmul.f32 %v1728, %v1750
  %v1752 = vsub.f32 1.0, %v1751
  %v1753 = vmul.f32 %v1750, %v1752
  %v1754 = vadd.f32 %v1750, %v1753
  %vm1755 = vweird.f32 %v1728
  %vm1756 = vweird.f32 %v1750
  %vm1757 = vmor %vm1755, %vm1756
  %v1758 = vsel %vm1757, %v1750, %v1754
  %v1759 = vand.u32 2147483647, %v1728
  %vm1760 = vcmp.eq.f32.partialorder %v1759, 8.507059e+37
  %v1761 = vand.u32 %v1728, 2147483648
  %v1762 = vor.u32 1.1754944e-38, %v1761
  %v1763 = vsel %vm1760, %v1762, %v1758
  %v1764 = vmul.f32 1.0, %v1763
  %v1765 = vrcp.pop %v1729
  %v1766 = vmul.f32 %v1729, %v1765
  %v1767 = vsub.f32 1.0, %v1766
  %v1768 = vmul.f32 %v1765, %v1767
  %v1769 = vadd.f32 %v1765, %v1768
  %vm1770 = vweird.f32 %v1729
  %vm1771 = vweird.f32 %v1765
  %vm1772 = vmor %vm1770, %vm1771
  %v1773 = vsel %vm1772, %v1765, %v1769
  %v1774 = vand.u32 2147483647, %v1729
  %vm1775 = vcmp.eq.f32.partialorder %v1774, 8.507059e+37
  %v1776 = vand.u32 %v1729, 2147483648
  %v1777 = vor.u32 1.1754944e-38, %v1776
  %v1778 = vsel %vm1775, %v1777, %v1773
  %v1779 = vmul.f32 1.0, %v1778
  %v1780 = vrcp.pop %v1730
  %v1781 = vmul.f32 %v1730, %v1780
  %v1782 = vsub.f32 1.0, %v1781
  %v1783 = vmul.f32 %v1780, %v1782
  %v1784 = vadd.f32 %v1780, %v1783
  %vm1785 = vweird.f32 %v1730
  %vm1786 = vweird.f32 %v1780
  %vm1787 = vmor %vm1785, %vm1786
  %v1788 = vsel %vm1787, %v1780, %v1784
  %v1789 = vand.u32 2147483647, %v1730
  %vm1790 = vcmp.eq.f32.partialorder %v1789, 8.507059e+37
  %v1791 = vand.u32 %v1730, 2147483648
  %v1792 = vor.u32 1.1754944e-38, %v1791
  %v1793 = vsel %vm1790, %v1792, %v1788
  %v1794 = vmul.f32 1.0, %v1793
  %v1795 = vrcp.pop %v1731
  %v1796 = vmul.f32 %v1731, %v1795
  %v1797 = vsub.f32 1.0, %v1796
  %v1798 = vmul.f32 %v1795, %v1797
  %v1799 = vadd.f32 %v1795, %v1798
  %vm1800 = vweird.f32 %v1731
  %vm1801 = vweird.f32 %v1795
  %vm1802 = vmor %vm1800, %vm1801
  %v1803 = vsel %vm1802, %v1795, %v1799
  %v1804 = vand.u32 2147483647, %v1731
  %vm1805 = vcmp.eq.f32.partialorder %v1804, 8.507059e+37
  %v1806 = vand.u32 %v1731, 2147483648
  %v1807 = vor.u32 1.1754944e-38, %v1806
  %v1808 = vsel %vm1805, %v1807, %v1803
  %v1809 = vmul.f32 1.0, %v1808
  %v1810 = vrcp.pop %v1732
  %v1811 = vmul.f32 %v1732, %v1810
  %v1812 = vsub.f32 1.0, %v1811
  %v1813 = vmul.f32 %v1810, %v1812
  %v1814 = vadd.f32 %v1810, %v1813
  %vm1815 = vweird.f32 %v1732
  %vm1816 = vweird.f32 %v1810
  %vm1817 = vmor %vm1815, %vm1816
  %v1818 = vsel %vm1817, %v1810, %v1814
  %v1819 = vand.u32 2147483647, %v1732
  %vm1820 = vcmp.eq.f32.partialorder %v1819, 8.507059e+37
  %v1821 = vand.u32 %v1732, 2147483648
  %v1822 = vor.u32 1.1754944e-38, %v1821
  %v1823 = vsel %vm1820, %v1822, %v1818
  %v1824 = vmul.f32 1.0, %v1823
  %v1825 = vrcp.pop %v1733
  %v1826 = vmul.f32 %v1733, %v1825
  %v1827 = vsub.f32 1.0, %v1826
  %v1828 = vmul.f32 %v1825, %v1827
  %v1829 = vadd.f32 %v1825, %v1828
  %vm1830 = vweird.f32 %v1733
  %vm1831 = vweird.f32 %v1825
  %vm1832 = vmor %vm1830, %vm1831
  %v1833 = vsel %vm1832, %v1825, %v1829
  %v1834 = vand.u32 2147483647, %v1733
  %vm1835 = vcmp.eq.f32.partialorder %v1834, 8.507059e+37
  %v1836 = vand.u32 %v1733, 2147483648
  %v1837 = vor.u32 1.1754944e-38, %v1836
  %v1838 = vsel %vm1835, %v1837, %v1833
  %v1839 = vmul.f32 1.0, %v1838
  %v1840 = vrcp.pop %v1734
  %v1841 = vmul.f32 %v1734, %v1840
  %v1842 = vsub.f32 1.0, %v1841
  %v1843 = vmul.f32 %v1840, %v1842
  %v1844 = vadd.f32 %v1840, %v1843
  %vm1845 = vweird.f32 %v1734
  %vm1846 = vweird.f32 %v1840
  %vm1847 = vmor %vm1845, %vm1846
  %v1848 = vsel %vm1847, %v1840, %v1844
  %v1849 = vand.u32 2147483647, %v1734
  %vm1850 = vcmp.eq.f32.partialorder %v1849, 8.507059e+37
  %v1851 = vand.u32 %v1734, 2147483648
  %v1852 = vor.u32 1.1754944e-38, %v1851
  %v1853 = vsel %vm1850, %v1852, %v1848
  %v1854 = vmul.f32 1.0, %v1853
  %v1855 = vtanh.pop %v1695
  %v1856 = vtanh.pop %v1696
  %v1857 = vtanh.pop %v1697
  %v1858 = vtanh.pop %v1698
  %v1859 = vtanh.pop %v1699
  %v1860 = vtanh.pop %v1700
  %v1861 = vtanh.pop %v1701
  %v1862 = vtanh.pop %v1702
  %v1871 = vrot.slane %v1577, 7
  %v1872 = vrot.slane %v1578, 7
  %v1873 = vrot.slane %v1579, 7
  %v1874 = vrot.slane %v1580, 7
  %v1875 = vrot.slane %v1581, 7
  %v1876 = vrot.slane %v1582, 7
  %v1877 = vrot.slane %v1583, 7
  %v1878 = vrot.slane %v1584, 7
  %v1887 = vmul.f32 %v1749, %v1871
  %v1888 = vmul.f32 %v1764, %v1872
  %v1889 = vmul.f32 %v1779, %v1873
  %v1890 = vmul.f32 %v1794, %v1874
  %v1891 = vmul.f32 %v1809, %v1875
  %v1892 = vmul.f32 %v1824, %v1876
  %v1893 = vmul.f32 %v1839, %v1877
  %v1894 = vmul.f32 %v1854, %v1878
  %1903 = vrot.lane.b32.xlu0 %v1855, 64
  %v1904 = vpop.permute.xlu0 %1903
  %1905 = vrot.lane.b32.xlu0 %v1856, 64
  %v1906 = vpop.permute.xlu0 %1905
  %1907 = vrot.lane.b32.xlu0 %v1857, 64
  %v1908 = vpop.permute.xlu0 %1907
  %1909 = vrot.lane.b32.xlu0 %v1858, 64
  %v1910 = vpop.permute.xlu0 %1909
  %1911 = vrot.lane.b32.xlu0 %v1859, 64
  %v1912 = vpop.permute.xlu0 %1911
  %1913 = vrot.lane.b32.xlu0 %v1860, 64
  %v1914 = vpop.permute.xlu0 %1913
  %1915 = vrot.lane.b32.xlu0 %v1861, 64
  %v1916 = vpop.permute.xlu0 %1915
  %1917 = vrot.lane.b32.xlu0 %v1862, 64
  %v1918 = vpop.permute.xlu0 %1917
  %v1927 = vmul.f32 %v1749, %v1904
  %v1928 = vmul.f32 %v1764, %v1906
  %v1929 = vmul.f32 %v1779, %v1908
  %v1930 = vmul.f32 %v1794, %v1910
  %v1931 = vmul.f32 %v1809, %v1912
  %v1932 = vmul.f32 %v1824, %v1914
  %v1933 = vmul.f32 %v1839, %v1916
  %v1934 = vmul.f32 %v1854, %v1918
  %1943 = vrot.lane.b32.xlu0 %v1927, 32
  %v1944 = vpop.permute.xlu0 %1943
  %1945 = vrot.lane.b32.xlu0 %v1928, 32
  %v1946 = vpop.permute.xlu0 %1945
  %1947 = vrot.lane.b32.xlu0 %v1929, 32
  %v1948 = vpop.permute.xlu0 %1947
  %1949 = vrot.lane.b32.xlu0 %v1930, 32
  %v1950 = vpop.permute.xlu0 %1949
  %1951 = vrot.lane.b32.xlu0 %v1931, 32
  %v1952 = vpop.permute.xlu0 %1951
  %1953 = vrot.lane.b32.xlu0 %v1932, 32
  %v1954 = vpop.permute.xlu0 %1953
  %1955 = vrot.lane.b32.xlu0 %v1933, 32
  %v1956 = vpop.permute.xlu0 %1955
  %1957 = vrot.lane.b32.xlu0 %v1934, 32
  %v1958 = vpop.permute.xlu0 %1957
  %v1967 = vadd.f32 %v1887, %v1944
  %v1968 = vadd.f32 %v1888, %v1946
  %v1969 = vadd.f32 %v1889, %v1948
  %v1970 = vadd.f32 %v1890, %v1950
  %v1971 = vadd.f32 %v1891, %v1952
  %v1972 = vadd.f32 %v1892, %v1954
  %v1973 = vadd.f32 %v1893, %v1956
  %v1974 = vadd.f32 %v1894, %v1958
  %v1975 = vtanh.pop %v1967
  %v1976 = vtanh.pop %v1968
  %v1977 = vtanh.pop %v1969
  %v1978 = vtanh.pop %v1970
  %v1979 = vtanh.pop %v1971
  %v1980 = vtanh.pop %v1972
  %v1981 = vtanh.pop %v1973
  %v1982 = vtanh.pop %v1974
  %1991 = vrot.lane.b32.xlu0 %v1975, 64
  %v1992 = vpop.permute.xlu0 %1991
  %1993 = vrot.lane.b32.xlu0 %v1976, 64
  %v1994 = vpop.permute.xlu0 %1993
  %1995 = vrot.lane.b32.xlu0 %v1977, 64
  %v1996 = vpop.permute.xlu0 %1995
  %1997 = vrot.lane.b32.xlu0 %v1978, 64
  %v1998 = vpop.permute.xlu0 %1997
  %1999 = vrot.lane.b32.xlu0 %v1979, 64
  %v2000 = vpop.permute.xlu0 %1999
  %2001 = vrot.lane.b32.xlu0 %v1980, 64
  %v2002 = vpop.permute.xlu0 %2001
  %2003 = vrot.lane.b32.xlu0 %v1981, 64
  %v2004 = vpop.permute.xlu0 %2003
  %2005 = vrot.lane.b32.xlu0 %v1982, 64
  %v2006 = vpop.permute.xlu0 %2005
  %v2015 = vmul.f32 %v1749, %v1992
  %v2016 = vmul.f32 %v1764, %v1994
  %v2017 = vmul.f32 %v1779, %v1996
  %v2018 = vmul.f32 %v1794, %v1998
  %v2019 = vmul.f32 %v1809, %v2000
  %v2020 = vmul.f32 %v1824, %v2002
  %v2021 = vmul.f32 %v1839, %v2004
  %v2022 = vmul.f32 %v1854, %v2006
  %v2031 = vrot.slane %v2015, 4
  %v2032 = vrot.slane %v2016, 3
  %v2033 = vsel %vm465, %v2032, %v2031
  %v2034 = vrot.slane %v2017, 2
  %v2035 = vsel %vm468, %v2034, %v2033
  %v2036 = vrot.slane %v2018, 1
  %v2037 = vsel %vm471, %v2036, %v2035
  %v2038 = vsel %vm474, %v2019, %v2037
  %v2039 = vrot.slane %v2020, 7
  %v2040 = vsel %vm477, %v2039, %v2038
  %v2041 = vrot.slane %v2021, 6
  %v2042 = vsel %vm480, %v2041, %v2040
  %v2043 = vrot.slane %v2022, 5
  %v2044 = vsel %vm483, %v2043, %v2042
  %2045 = vrot.lane.b32.xlu0 %v2044, 32
  %v2046 = vpop.permute.xlu0 %2045
  %v2047 = vsel %vm112, %v2046, 0
  %2049 = vmatpush.msra.mxu0 0.0
  %2050 = vmatpush.msra.mxu0 0.0
  %2051 = vmatpush.msra.mxu0 0.0
  %2052 = vmatpush.msra.mxu0 0.0
  %2053 = vmatpush.msra.mxu0 0.0
  %2054 = vmatpush.msra.mxu0 0.0
  %2055 = vmatpush.msra.mxu0 0.0
  %2056 = vmatpush.msra.mxu0 0.0
  %2057 = vmatpush.msra.mxu0 0.0
  %2058 = vmatpush.msra.mxu0 0.0
  %2059 = vmatpush.msra.mxu0 0.0
  %2060 = vmatpush.msra.mxu0 0.0
  %2061 = vmatpush.msra.mxu0 %v28
  %2062 = vmatpush.msra.mxu0 %v27
  %2063 = vmatpush.msra.mxu0 %v26
  %2064 = vmatpush.msra.mxu0 %v25
  %2065 = vmatmul.f32.gmra.mxu0 %v2047
  %v2066 = vpop.f32.mrf.mxu0
  %v2067 = vadd.f32 0.0, %v2066
  %2068 = vdwg.mxu0
  %v2070 = vrot.slane %v2067, 3
  %v2071 = vrot.slane %v2067, 4
  %v2072 = vrot.slane %v2067, 5
  %v2073 = vrot.slane %v2067, 6
  %v2074 = vrot.slane %v2067, 7
  %v2075 = vrot.slane %v2067, 1
  %v2076 = vrot.slane %v2067, 2
  %v2085 = vadd.f32 %v89, %v2070
  %v2086 = vadd.f32 %v92, %v2071
  %v2087 = vadd.f32 %v95, %v2072
  %v2088 = vadd.f32 %v98, %v2073
  %v2089 = vadd.f32 %v101, %v2074
  %v2090 = vadd.f32 %v104, %v2067
  %v2091 = vadd.f32 %v107, %v2075
  %v2092 = vadd.f32 %v110, %v2076
  %v2093 = vxor.u32 %v2085, 2147483648
  %v2094 = vxor.u32 %v2086, 2147483648
  %v2095 = vxor.u32 %v2087, 2147483648
  %v2096 = vxor.u32 %v2088, 2147483648
  %v2097 = vxor.u32 %v2089, 2147483648
  %v2098 = vxor.u32 %v2090, 2147483648
  %v2099 = vxor.u32 %v2091, 2147483648
  %v2100 = vxor.u32 %v2092, 2147483648
  %v2101 = vmul.f32 %v2093, 1.442695
  %v2102 = vpow.pop %v2101
  %v2103 = vmul.f32 %v2094, 1.442695
  %v2104 = vpow.pop %v2103
  %v2105 = vmul.f32 %v2095, 1.442695
  %v2106 = vpow.pop %v2105
  %v2107 = vmul.f32 %v2096, 1.442695
  %v2108 = vpow.pop %v2107
  %v2109 = vmul.f32 %v2097, 1.442695
  %v2110 = vpow.pop %v2109
  %v2111 = vmul.f32 %v2098, 1.442695
  %v2112 = vpow.pop %v2111
  %v2113 = vmul.f32 %v2099, 1.442695
  %v2114 = vpow.pop %v2113
  %v2115 = vmul.f32 %v2100, 1.442695
  %v2116 = vpow.pop %v2115
  %v2117 = vadd.f32 %v2102, 1.0
  %v2118 = vadd.f32 %v2104, 1.0
  %v2119 = vadd.f32 %v2106, 1.0
  %v2120 = vadd.f32 %v2108, 1.0
  %v2121 = vadd.f32 %v2110, 1.0
  %v2122 = vadd.f32 %v2112, 1.0
  %v2123 = vadd.f32 %v2114, 1.0
  %v2124 = vadd.f32 %v2116, 1.0
  %v2125 = vrcp.pop %v2117
  %v2126 = vmul.f32 %v2117, %v2125
  %v2127 = vsub.f32 1.0, %v2126
  %v2128 = vmul.f32 %v2125, %v2127
  %v2129 = vadd.f32 %v2125, %v2128
  %vm2130 = vweird.f32 %v2117
  %vm2131 = vweird.f32 %v2125
  %vm2132 = vmor %vm2130, %vm2131
  %v2133 = vsel %vm2132, %v2125, %v2129
  %v2134 = vand.u32 2147483647, %v2117
  %vm2135 = vcmp.eq.f32.partialorder %v2134, 8.507059e+37
  %v2136 = vand.u32 %v2117, 2147483648
  %v2137 = vor.u32 1.1754944e-38, %v2136
  %v2138 = vsel %vm2135, %v2137, %v2133
  %v2139 = vmul.f32 1.0, %v2138
  %v2140 = vrcp.pop %v2118
  %v2141 = vmul.f32 %v2118, %v2140
  %v2142 = vsub.f32 1.0, %v2141
  %v2143 = vmul.f32 %v2140, %v2142
  %v2144 = vadd.f32 %v2140, %v2143
  %vm2145 = vweird.f32 %v2118
  %vm2146 = vweird.f32 %v2140
  %vm2147 = vmor %vm2145, %vm2146
  %v2148 = vsel %vm2147, %v2140, %v2144
  %v2149 = vand.u32 2147483647, %v2118
  %vm2150 = vcmp.eq.f32.partialorder %v2149, 8.507059e+37
  %v2151 = vand.u32 %v2118, 2147483648
  %v2152 = vor.u32 1.1754944e-38, %v2151
  %v2153 = vsel %vm2150, %v2152, %v2148
  %v2154 = vmul.f32 1.0, %v2153
  %v2155 = vrcp.pop %v2119
  %v2156 = vmul.f32 %v2119, %v2155
  %v2157 = vsub.f32 1.0, %v2156
  %v2158 = vmul.f32 %v2155, %v2157
  %v2159 = vadd.f32 %v2155, %v2158
  %vm2160 = vweird.f32 %v2119
  %vm2161 = vweird.f32 %v2155
  %vm2162 = vmor %vm2160, %vm2161
  %v2163 = vsel %vm2162, %v2155, %v2159
  %v2164 = vand.u32 2147483647, %v2119
  %vm2165 = vcmp.eq.f32.partialorder %v2164, 8.507059e+37
  %v2166 = vand.u32 %v2119, 2147483648
  %v2167 = vor.u32 1.1754944e-38, %v2166
  %v2168 = vsel %vm2165, %v2167, %v2163
  %v2169 = vmul.f32 1.0, %v2168
  %v2170 = vrcp.pop %v2120
  %v2171 = vmul.f32 %v2120, %v2170
  %v2172 = vsub.f32 1.0, %v2171
  %v2173 = vmul.f32 %v2170, %v2172
  %v2174 = vadd.f32 %v2170, %v2173
  %vm2175 = vweird.f32 %v2120
  %vm2176 = vweird.f32 %v2170
  %vm2177 = vmor %vm2175, %vm2176
  %v2178 = vsel %vm2177, %v2170, %v2174
  %v2179 = vand.u32 2147483647, %v2120
  %vm2180 = vcmp.eq.f32.partialorder %v2179, 8.507059e+37
  %v2181 = vand.u32 %v2120, 2147483648
  %v2182 = vor.u32 1.1754944e-38, %v2181
  %v2183 = vsel %vm2180, %v2182, %v2178
  %v2184 = vmul.f32 1.0, %v2183
  %v2185 = vrcp.pop %v2121
  %v2186 = vmul.f32 %v2121, %v2185
  %v2187 = vsub.f32 1.0, %v2186
  %v2188 = vmul.f32 %v2185, %v2187
  %v2189 = vadd.f32 %v2185, %v2188
  %vm2190 = vweird.f32 %v2121
  %vm2191 = vweird.f32 %v2185
  %vm2192 = vmor %vm2190, %vm2191
  %v2193 = vsel %vm2192, %v2185, %v2189
  %v2194 = vand.u32 2147483647, %v2121
  %vm2195 = vcmp.eq.f32.partialorder %v2194, 8.507059e+37
  %v2196 = vand.u32 %v2121, 2147483648
  %v2197 = vor.u32 1.1754944e-38, %v2196
  %v2198 = vsel %vm2195, %v2197, %v2193
  %v2199 = vmul.f32 1.0, %v2198
  %v2200 = vrcp.pop %v2122
  %v2201 = vmul.f32 %v2122, %v2200
  %v2202 = vsub.f32 1.0, %v2201
  %v2203 = vmul.f32 %v2200, %v2202
  %v2204 = vadd.f32 %v2200, %v2203
  %vm2205 = vweird.f32 %v2122
  %vm2206 = vweird.f32 %v2200
  %vm2207 = vmor %vm2205, %vm2206
  %v2208 = vsel %vm2207, %v2200, %v2204
  %v2209 = vand.u32 2147483647, %v2122
  %vm2210 = vcmp.eq.f32.partialorder %v2209, 8.507059e+37
  %v2211 = vand.u32 %v2122, 2147483648
  %v2212 = vor.u32 1.1754944e-38, %v2211
  %v2213 = vsel %vm2210, %v2212, %v2208
  %v2214 = vmul.f32 1.0, %v2213
  %v2215 = vrcp.pop %v2123
  %v2216 = vmul.f32 %v2123, %v2215
  %v2217 = vsub.f32 1.0, %v2216
  %v2218 = vmul.f32 %v2215, %v2217
  %v2219 = vadd.f32 %v2215, %v2218
  %vm2220 = vweird.f32 %v2123
  %vm2221 = vweird.f32 %v2215
  %vm2222 = vmor %vm2220, %vm2221
  %v2223 = vsel %vm2222, %v2215, %v2219
  %v2224 = vand.u32 2147483647, %v2123
  %vm2225 = vcmp.eq.f32.partialorder %v2224, 8.507059e+37
  %v2226 = vand.u32 %v2123, 2147483648
  %v2227 = vor.u32 1.1754944e-38, %v2226
  %v2228 = vsel %vm2225, %v2227, %v2223
  %v2229 = vmul.f32 1.0, %v2228
  %v2230 = vrcp.pop %v2124
  %v2231 = vmul.f32 %v2124, %v2230
  %v2232 = vsub.f32 1.0, %v2231
  %v2233 = vmul.f32 %v2230, %v2232
  %v2234 = vadd.f32 %v2230, %v2233
  %vm2235 = vweird.f32 %v2124
  %vm2236 = vweird.f32 %v2230
  %vm2237 = vmor %vm2235, %vm2236
  %v2238 = vsel %vm2237, %v2230, %v2234
  %v2239 = vand.u32 2147483647, %v2124
  %vm2240 = vcmp.eq.f32.partialorder %v2239, 8.507059e+37
  %v2241 = vand.u32 %v2124, 2147483648
  %v2242 = vor.u32 1.1754944e-38, %v2241
  %v2243 = vsel %vm2240, %v2242, %v2238
  %v2244 = vmul.f32 1.0, %v2243
  %v2245 = vtanh.pop %v2085
  %v2246 = vtanh.pop %v2086
  %v2247 = vtanh.pop %v2087
  %v2248 = vtanh.pop %v2088
  %v2249 = vtanh.pop %v2089
  %v2250 = vtanh.pop %v2090
  %v2251 = vtanh.pop %v2091
  %v2252 = vtanh.pop %v2092
  %v2261 = vrot.slane %v1967, 7
  %v2262 = vrot.slane %v1968, 7
  %v2263 = vrot.slane %v1969, 7
  %v2264 = vrot.slane %v1970, 7
  %v2265 = vrot.slane %v1971, 7
  %v2266 = vrot.slane %v1972, 7
  %v2267 = vrot.slane %v1973, 7
  %v2268 = vrot.slane %v1974, 7
  %v2277 = vmul.f32 %v2139, %v2261
  %v2278 = vmul.f32 %v2154, %v2262
  %v2279 = vmul.f32 %v2169, %v2263
  %v2280 = vmul.f32 %v2184, %v2264
  %v2281 = vmul.f32 %v2199, %v2265
  %v2282 = vmul.f32 %v2214, %v2266
  %v2283 = vmul.f32 %v2229, %v2267
  %v2284 = vmul.f32 %v2244, %v2268
  %2293 = vrot.lane.b32.xlu0 %v2245, 64
  %v2294 = vpop.permute.xlu0 %2293
  %2295 = vrot.lane.b32.xlu0 %v2246, 64
  %v2296 = vpop.permute.xlu0 %2295
  %2297 = vrot.lane.b32.xlu0 %v2247, 64
  %v2298 = vpop.permute.xlu0 %2297
  %2299 = vrot.lane.b32.xlu0 %v2248, 64
  %v2300 = vpop.permute.xlu0 %2299
  %2301 = vrot.lane.b32.xlu0 %v2249, 64
  %v2302 = vpop.permute.xlu0 %2301
  %2303 = vrot.lane.b32.xlu0 %v2250, 64
  %v2304 = vpop.permute.xlu0 %2303
  %2305 = vrot.lane.b32.xlu0 %v2251, 64
  %v2306 = vpop.permute.xlu0 %2305
  %2307 = vrot.lane.b32.xlu0 %v2252, 64
  %v2308 = vpop.permute.xlu0 %2307
  %v2317 = vmul.f32 %v2139, %v2294
  %v2318 = vmul.f32 %v2154, %v2296
  %v2319 = vmul.f32 %v2169, %v2298
  %v2320 = vmul.f32 %v2184, %v2300
  %v2321 = vmul.f32 %v2199, %v2302
  %v2322 = vmul.f32 %v2214, %v2304
  %v2323 = vmul.f32 %v2229, %v2306
  %v2324 = vmul.f32 %v2244, %v2308
  %2333 = vrot.lane.b32.xlu0 %v2317, 32
  %v2334 = vpop.permute.xlu0 %2333
  %2335 = vrot.lane.b32.xlu0 %v2318, 32
  %v2336 = vpop.permute.xlu0 %2335
  %2337 = vrot.lane.b32.xlu0 %v2319, 32
  %v2338 = vpop.permute.xlu0 %2337
  %2339 = vrot.lane.b32.xlu0 %v2320, 32
  %v2340 = vpop.permute.xlu0 %2339
  %2341 = vrot.lane.b32.xlu0 %v2321, 32
  %v2342 = vpop.permute.xlu0 %2341
  %2343 = vrot.lane.b32.xlu0 %v2322, 32
  %v2344 = vpop.permute.xlu0 %2343
  %2345 = vrot.lane.b32.xlu0 %v2323, 32
  %v2346 = vpop.permute.xlu0 %2345
  %2347 = vrot.lane.b32.xlu0 %v2324, 32
  %v2348 = vpop.permute.xlu0 %2347
  %v2357 = vadd.f32 %v2277, %v2334
  %v2358 = vadd.f32 %v2278, %v2336
  %v2359 = vadd.f32 %v2279, %v2338
  %v2360 = vadd.f32 %v2280, %v2340
  %v2361 = vadd.f32 %v2281, %v2342
  %v2362 = vadd.f32 %v2282, %v2344
  %v2363 = vadd.f32 %v2283, %v2346
  %v2364 = vadd.f32 %v2284, %v2348
  %v2365 = vtanh.pop %v2357
  %v2366 = vtanh.pop %v2358
  %v2367 = vtanh.pop %v2359
  %v2368 = vtanh.pop %v2360
  %v2369 = vtanh.pop %v2361
  %v2370 = vtanh.pop %v2362
  %v2371 = vtanh.pop %v2363
  %v2372 = vtanh.pop %v2364
  %2381 = vrot.lane.b32.xlu0 %v2365, 64
  %v2382 = vpop.permute.xlu0 %2381
  %2383 = vrot.lane.b32.xlu0 %v2366, 64
  %v2384 = vpop.permute.xlu0 %2383
  %2385 = vrot.lane.b32.xlu0 %v2367, 64
  %v2386 = vpop.permute.xlu0 %2385
  %2387 = vrot.lane.b32.xlu0 %v2368, 64
  %v2388 = vpop.permute.xlu0 %2387
  %2389 = vrot.lane.b32.xlu0 %v2369, 64
  %v2390 = vpop.permute.xlu0 %2389
  %2391 = vrot.lane.b32.xlu0 %v2370, 64
  %v2392 = vpop.permute.xlu0 %2391
  %2393 = vrot.lane.b32.xlu0 %v2371, 64
  %v2394 = vpop.permute.xlu0 %2393
  %2395 = vrot.lane.b32.xlu0 %v2372, 64
  %v2396 = vpop.permute.xlu0 %2395
  %v2405 = vmul.f32 %v2139, %v2382
  %v2406 = vmul.f32 %v2154, %v2384
  %v2407 = vmul.f32 %v2169, %v2386
  %v2408 = vmul.f32 %v2184, %v2388
  %v2409 = vmul.f32 %v2199, %v2390
  %v2410 = vmul.f32 %v2214, %v2392
  %v2411 = vmul.f32 %v2229, %v2394
  %v2412 = vmul.f32 %v2244, %v2396
  %v2421 = vrot.slane %v2405, 5
  %v2422 = vrot.slane %v2406, 4
  %v2423 = vsel %vm465, %v2422, %v2421
  %v2424 = vrot.slane %v2407, 3
  %v2425 = vsel %vm468, %v2424, %v2423
  %v2426 = vrot.slane %v2408, 2
  %v2427 = vsel %vm471, %v2426, %v2425
  %v2428 = vrot.slane %v2409, 1
  %v2429 = vsel %vm474, %v2428, %v2427
  %v2430 = vsel %vm477, %v2410, %v2429
  %v2431 = vrot.slane %v2411, 7
  %v2432 = vsel %vm480, %v2431, %v2430
  %v2433 = vrot.slane %v2412, 6
  %v2434 = vsel %vm483, %v2433, %v2432
  %2435 = vrot.lane.b32.xlu0 %v2434, 32
  %v2436 = vpop.permute.xlu0 %2435
  %v2437 = vsel %vm112, %v2436, 0
  %2439 = vmatpush.msra.mxu0 0.0
  %2440 = vmatpush.msra.mxu0 0.0
  %2441 = vmatpush.msra.mxu0 0.0
  %2442 = vmatpush.msra.mxu0 0.0
  %2443 = vmatpush.msra.mxu0 0.0
  %2444 = vmatpush.msra.mxu0 0.0
  %2445 = vmatpush.msra.mxu0 0.0
  %2446 = vmatpush.msra.mxu0 0.0
  %2447 = vmatpush.msra.mxu0 0.0
  %2448 = vmatpush.msra.mxu0 0.0
  %2449 = vmatpush.msra.mxu0 0.0
  %2450 = vmatpush.msra.mxu0 0.0
  %2451 = vmatpush.msra.mxu0 %v28
  %2452 = vmatpush.msra.mxu0 %v27
  %2453 = vmatpush.msra.mxu0 %v26
  %2454 = vmatpush.msra.mxu0 %v25
  %2455 = vmatmul.f32.gmra.mxu0 %v2437
  %v2456 = vpop.f32.mrf.mxu0
  %v2457 = vadd.f32 0.0, %v2456
  %2458 = vdwg.mxu0
  %v2460 = vrot.slane %v2457, 2
  %v2461 = vrot.slane %v2457, 3
  %v2462 = vrot.slane %v2457, 4
  %v2463 = vrot.slane %v2457, 5
  %v2464 = vrot.slane %v2457, 6
  %v2465 = vrot.slane %v2457, 7
  %v2466 = vrot.slane %v2457, 1
  %v2475 = vadd.f32 %v89, %v2460
  %v2476 = vadd.f32 %v92, %v2461
  %v2477 = vadd.f32 %v95, %v2462
  %v2478 = vadd.f32 %v98, %v2463
  %v2479 = vadd.f32 %v101, %v2464
  %v2480 = vadd.f32 %v104, %v2465
  %v2481 = vadd.f32 %v107, %v2457
  %v2482 = vadd.f32 %v110, %v2466
  %v2483 = vxor.u32 %v2475, 2147483648
  %v2484 = vxor.u32 %v2476, 2147483648
  %v2485 = vxor.u32 %v2477, 2147483648
  %v2486 = vxor.u32 %v2478, 2147483648
  %v2487 = vxor.u32 %v2479, 2147483648
  %v2488 = vxor.u32 %v2480, 2147483648
  %v2489 = vxor.u32 %v2481, 2147483648
  %v2490 = vxor.u32 %v2482, 2147483648
  %v2491 = vmul.f32 %v2483, 1.442695
  %v2492 = vpow.pop %v2491
  %v2493 = vmul.f32 %v2484, 1.442695
  %v2494 = vpow.pop %v2493
  %v2495 = vmul.f32 %v2485, 1.442695
  %v2496 = vpow.pop %v2495
  %v2497 = vmul.f32 %v2486, 1.442695
  %v2498 = vpow.pop %v2497
  %v2499 = vmul.f32 %v2487, 1.442695
  %v2500 = vpow.pop %v2499
  %v2501 = vmul.f32 %v2488, 1.442695
  %v2502 = vpow.pop %v2501
  %v2503 = vmul.f32 %v2489, 1.442695
  %v2504 = vpow.pop %v2503
  %v2505 = vmul.f32 %v2490, 1.442695
  %v2506 = vpow.pop %v2505
  %v2507 = vadd.f32 %v2492, 1.0
  %v2508 = vadd.f32 %v2494, 1.0
  %v2509 = vadd.f32 %v2496, 1.0
  %v2510 = vadd.f32 %v2498, 1.0
  %v2511 = vadd.f32 %v2500, 1.0
  %v2512 = vadd.f32 %v2502, 1.0
  %v2513 = vadd.f32 %v2504, 1.0
  %v2514 = vadd.f32 %v2506, 1.0
  %v2515 = vrcp.pop %v2507
  %v2516 = vmul.f32 %v2507, %v2515
  %v2517 = vsub.f32 1.0, %v2516
  %v2518 = vmul.f32 %v2515, %v2517
  %v2519 = vadd.f32 %v2515, %v2518
  %vm2520 = vweird.f32 %v2507
  %vm2521 = vweird.f32 %v2515
  %vm2522 = vmor %vm2520, %vm2521
  %v2523 = vsel %vm2522, %v2515, %v2519
  %v2524 = vand.u32 2147483647, %v2507
  %vm2525 = vcmp.eq.f32.partialorder %v2524, 8.507059e+37
  %v2526 = vand.u32 %v2507, 2147483648
  %v2527 = vor.u32 1.1754944e-38, %v2526
  %v2528 = vsel %vm2525, %v2527, %v2523
  %v2529 = vmul.f32 1.0, %v2528
  %v2530 = vrcp.pop %v2508
  %v2531 = vmul.f32 %v2508, %v2530
  %v2532 = vsub.f32 1.0, %v2531
  %v2533 = vmul.f32 %v2530, %v2532
  %v2534 = vadd.f32 %v2530, %v2533
  %vm2535 = vweird.f32 %v2508
  %vm2536 = vweird.f32 %v2530
  %vm2537 = vmor %vm2535, %vm2536
  %v2538 = vsel %vm2537, %v2530, %v2534
  %v2539 = vand.u32 2147483647, %v2508
  %vm2540 = vcmp.eq.f32.partialorder %v2539, 8.507059e+37
  %v2541 = vand.u32 %v2508, 2147483648
  %v2542 = vor.u32 1.1754944e-38, %v2541
  %v2543 = vsel %vm2540, %v2542, %v2538
  %v2544 = vmul.f32 1.0, %v2543
  %v2545 = vrcp.pop %v2509
  %v2546 = vmul.f32 %v2509, %v2545
  %v2547 = vsub.f32 1.0, %v2546
  %v2548 = vmul.f32 %v2545, %v2547
  %v2549 = vadd.f32 %v2545, %v2548
  %vm2550 = vweird.f32 %v2509
  %vm2551 = vweird.f32 %v2545
  %vm2552 = vmor %vm2550, %vm2551
  %v2553 = vsel %vm2552, %v2545, %v2549
  %v2554 = vand.u32 2147483647, %v2509
  %vm2555 = vcmp.eq.f32.partialorder %v2554, 8.507059e+37
  %v2556 = vand.u32 %v2509, 2147483648
  %v2557 = vor.u32 1.1754944e-38, %v2556
  %v2558 = vsel %vm2555, %v2557, %v2553
  %v2559 = vmul.f32 1.0, %v2558
  %v2560 = vrcp.pop %v2510
  %v2561 = vmul.f32 %v2510, %v2560
  %v2562 = vsub.f32 1.0, %v2561
  %v2563 = vmul.f32 %v2560, %v2562
  %v2564 = vadd.f32 %v2560, %v2563
  %vm2565 = vweird.f32 %v2510
  %vm2566 = vweird.f32 %v2560
  %vm2567 = vmor %vm2565, %vm2566
  %v2568 = vsel %vm2567, %v2560, %v2564
  %v2569 = vand.u32 2147483647, %v2510
  %vm2570 = vcmp.eq.f32.partialorder %v2569, 8.507059e+37
  %v2571 = vand.u32 %v2510, 2147483648
  %v2572 = vor.u32 1.1754944e-38, %v2571
  %v2573 = vsel %vm2570, %v2572, %v2568
  %v2574 = vmul.f32 1.0, %v2573
  %v2575 = vrcp.pop %v2511
  %v2576 = vmul.f32 %v2511, %v2575
  %v2577 = vsub.f32 1.0, %v2576
  %v2578 = vmul.f32 %v2575, %v2577
  %v2579 = vadd.f32 %v2575, %v2578
  %vm2580 = vweird.f32 %v2511
  %vm2581 = vweird.f32 %v2575
  %vm2582 = vmor %vm2580, %vm2581
  %v2583 = vsel %vm2582, %v2575, %v2579
  %v2584 = vand.u32 2147483647, %v2511
  %vm2585 = vcmp.eq.f32.partialorder %v2584, 8.507059e+37
  %v2586 = vand.u32 %v2511, 2147483648
  %v2587 = vor.u32 1.1754944e-38, %v2586
  %v2588 = vsel %vm2585, %v2587, %v2583
  %v2589 = vmul.f32 1.0, %v2588
  %v2590 = vrcp.pop %v2512
  %v2591 = vmul.f32 %v2512, %v2590
  %v2592 = vsub.f32 1.0, %v2591
  %v2593 = vmul.f32 %v2590, %v2592
  %v2594 = vadd.f32 %v2590, %v2593
  %vm2595 = vweird.f32 %v2512
  %vm2596 = vweird.f32 %v2590
  %vm2597 = vmor %vm2595, %vm2596
  %v2598 = vsel %vm2597, %v2590, %v2594
  %v2599 = vand.u32 2147483647, %v2512
  %vm2600 = vcmp.eq.f32.partialorder %v2599, 8.507059e+37
  %v2601 = vand.u32 %v2512, 2147483648
  %v2602 = vor.u32 1.1754944e-38, %v2601
  %v2603 = vsel %vm2600, %v2602, %v2598
  %v2604 = vmul.f32 1.0, %v2603
  %v2605 = vrcp.pop %v2513
  %v2606 = vmul.f32 %v2513, %v2605
  %v2607 = vsub.f32 1.0, %v2606
  %v2608 = vmul.f32 %v2605, %v2607
  %v2609 = vadd.f32 %v2605, %v2608
  %vm2610 = vweird.f32 %v2513
  %vm2611 = vweird.f32 %v2605
  %vm2612 = vmor %vm2610, %vm2611
  %v2613 = vsel %vm2612, %v2605, %v2609
  %v2614 = vand.u32 2147483647, %v2513
  %vm2615 = vcmp.eq.f32.partialorder %v2614, 8.507059e+37
  %v2616 = vand.u32 %v2513, 2147483648
  %v2617 = vor.u32 1.1754944e-38, %v2616
  %v2618 = vsel %vm2615, %v2617, %v2613
  %v2619 = vmul.f32 1.0, %v2618
  %v2620 = vrcp.pop %v2514
  %v2621 = vmul.f32 %v2514, %v2620
  %v2622 = vsub.f32 1.0, %v2621
  %v2623 = vmul.f32 %v2620, %v2622
  %v2624 = vadd.f32 %v2620, %v2623
  %vm2625 = vweird.f32 %v2514
  %vm2626 = vweird.f32 %v2620
  %vm2627 = vmor %vm2625, %vm2626
  %v2628 = vsel %vm2627, %v2620, %v2624
  %v2629 = vand.u32 2147483647, %v2514
  %vm2630 = vcmp.eq.f32.partialorder %v2629, 8.507059e+37
  %v2631 = vand.u32 %v2514, 2147483648
  %v2632 = vor.u32 1.1754944e-38, %v2631
  %v2633 = vsel %vm2630, %v2632, %v2628
  %v2634 = vmul.f32 1.0, %v2633
  %v2635 = vtanh.pop %v2475
  %v2636 = vtanh.pop %v2476
  %v2637 = vtanh.pop %v2477
  %v2638 = vtanh.pop %v2478
  %v2639 = vtanh.pop %v2479
  %v2640 = vtanh.pop %v2480
  %v2641 = vtanh.pop %v2481
  %v2642 = vtanh.pop %v2482
  %v2651 = vrot.slane %v2357, 7
  %v2652 = vrot.slane %v2358, 7
  %v2653 = vrot.slane %v2359, 7
  %v2654 = vrot.slane %v2360, 7
  %v2655 = vrot.slane %v2361, 7
  %v2656 = vrot.slane %v2362, 7
  %v2657 = vrot.slane %v2363, 7
  %v2658 = vrot.slane %v2364, 7
  %v2667 = vmul.f32 %v2529, %v2651
  %v2668 = vmul.f32 %v2544, %v2652
  %v2669 = vmul.f32 %v2559, %v2653
  %v2670 = vmul.f32 %v2574, %v2654
  %v2671 = vmul.f32 %v2589, %v2655
  %v2672 = vmul.f32 %v2604, %v2656
  %v2673 = vmul.f32 %v2619, %v2657
  %v2674 = vmul.f32 %v2634, %v2658
  %2683 = vrot.lane.b32.xlu0 %v2635, 64
  %v2684 = vpop.permute.xlu0 %2683
  %2685 = vrot.lane.b32.xlu0 %v2636, 64
  %v2686 = vpop.permute.xlu0 %2685
  %2687 = vrot.lane.b32.xlu0 %v2637, 64
  %v2688 = vpop.permute.xlu0 %2687
  %2689 = vrot.lane.b32.xlu0 %v2638, 64
  %v2690 = vpop.permute.xlu0 %2689
  %2691 = vrot.lane.b32.xlu0 %v2639, 64
  %v2692 = vpop.permute.xlu0 %2691
  %2693 = vrot.lane.b32.xlu0 %v2640, 64
  %v2694 = vpop.permute.xlu0 %2693
  %2695 = vrot.lane.b32.xlu0 %v2641, 64
  %v2696 = vpop.permute.xlu0 %2695
  %2697 = vrot.lane.b32.xlu0 %v2642, 64
  %v2698 = vpop.permute.xlu0 %2697
  %v2707 = vmul.f32 %v2529, %v2684
  %v2708 = vmul.f32 %v2544, %v2686
  %v2709 = vmul.f32 %v2559, %v2688
  %v2710 = vmul.f32 %v2574, %v2690
  %v2711 = vmul.f32 %v2589, %v2692
  %v2712 = vmul.f32 %v2604, %v2694
  %v2713 = vmul.f32 %v2619, %v2696
  %v2714 = vmul.f32 %v2634, %v2698
  %2723 = vrot.lane.b32.xlu0 %v2707, 32
  %v2724 = vpop.permute.xlu0 %2723
  %2725 = vrot.lane.b32.xlu0 %v2708, 32
  %v2726 = vpop.permute.xlu0 %2725
  %2727 = vrot.lane.b32.xlu0 %v2709, 32
  %v2728 = vpop.permute.xlu0 %2727
  %2729 = vrot.lane.b32.xlu0 %v2710, 32
  %v2730 = vpop.permute.xlu0 %2729
  %2731 = vrot.lane.b32.xlu0 %v2711, 32
  %v2732 = vpop.permute.xlu0 %2731
  %2733 = vrot.lane.b32.xlu0 %v2712, 32
  %v2734 = vpop.permute.xlu0 %2733
  %2735 = vrot.lane.b32.xlu0 %v2713, 32
  %v2736 = vpop.permute.xlu0 %2735
  %2737 = vrot.lane.b32.xlu0 %v2714, 32
  %v2738 = vpop.permute.xlu0 %2737
  %v2747 = vadd.f32 %v2667, %v2724
  %v2748 = vadd.f32 %v2668, %v2726
  %v2749 = vadd.f32 %v2669, %v2728
  %v2750 = vadd.f32 %v2670, %v2730
  %v2751 = vadd.f32 %v2671, %v2732
  %v2752 = vadd.f32 %v2672, %v2734
  %v2753 = vadd.f32 %v2673, %v2736
  %v2754 = vadd.f32 %v2674, %v2738
  %v2755 = vtanh.pop %v2747
  %v2756 = vtanh.pop %v2748
  %v2757 = vtanh.pop %v2749
  %v2758 = vtanh.pop %v2750
  %v2759 = vtanh.pop %v2751
  %v2760 = vtanh.pop %v2752
  %v2761 = vtanh.pop %v2753
  %v2762 = vtanh.pop %v2754
  %2771 = vrot.lane.b32.xlu0 %v2755, 64
  %v2772 = vpop.permute.xlu0 %2771
  %2773 = vrot.lane.b32.xlu0 %v2756, 64
  %v2774 = vpop.permute.xlu0 %2773
  %2775 = vrot.lane.b32.xlu0 %v2757, 64
  %v2776 = vpop.permute.xlu0 %2775
  %2777 = vrot.lane.b32.xlu0 %v2758, 64
  %v2778 = vpop.permute.xlu0 %2777
  %2779 = vrot.lane.b32.xlu0 %v2759, 64
  %v2780 = vpop.permute.xlu0 %2779
  %2781 = vrot.lane.b32.xlu0 %v2760, 64
  %v2782 = vpop.permute.xlu0 %2781
  %2783 = vrot.lane.b32.xlu0 %v2761, 64
  %v2784 = vpop.permute.xlu0 %2783
  %2785 = vrot.lane.b32.xlu0 %v2762, 64
  %v2786 = vpop.permute.xlu0 %2785
  %v2795 = vmul.f32 %v2529, %v2772
  %v2796 = vmul.f32 %v2544, %v2774
  %v2797 = vmul.f32 %v2559, %v2776
  %v2798 = vmul.f32 %v2574, %v2778
  %v2799 = vmul.f32 %v2589, %v2780
  %v2800 = vmul.f32 %v2604, %v2782
  %v2801 = vmul.f32 %v2619, %v2784
  %v2802 = vmul.f32 %v2634, %v2786
  %v2811 = vrot.slane %v2795, 6
  %v2812 = vrot.slane %v2796, 5
  %v2813 = vsel %vm465, %v2812, %v2811
  %v2814 = vrot.slane %v2797, 4
  %v2815 = vsel %vm468, %v2814, %v2813
  %v2816 = vrot.slane %v2798, 3
  %v2817 = vsel %vm471, %v2816, %v2815
  %v2818 = vrot.slane %v2799, 2
  %v2819 = vsel %vm474, %v2818, %v2817
  %v2820 = vrot.slane %v2800, 1
  %v2821 = vsel %vm477, %v2820, %v2819
  %v2822 = vsel %vm480, %v2801, %v2821
  %v2823 = vrot.slane %v2802, 7
  %v2824 = vsel %vm483, %v2823, %v2822
  %2825 = vrot.lane.b32.xlu0 %v2824, 32
  %v2826 = vpop.permute.xlu0 %2825
  %v2827 = vsel %vm112, %v2826, 0
  %2829 = vmatpush.msra.mxu0 0.0
  %2830 = vmatpush.msra.mxu0 0.0
  %2831 = vmatpush.msra.mxu0 0.0
  %2832 = vmatpush.msra.mxu0 0.0
  %2833 = vmatpush.msra.mxu0 0.0
  %2834 = vmatpush.msra.mxu0 0.0
  %2835 = vmatpush.msra.mxu0 0.0
  %2836 = vmatpush.msra.mxu0 0.0
  %2837 = vmatpush.msra.mxu0 0.0
  %2838 = vmatpush.msra.mxu0 0.0
  %2839 = vmatpush.msra.mxu0 0.0
  %2840 = vmatpush.msra.mxu0 0.0
  %2841 = vmatpush.msra.mxu0 %v28
  %2842 = vmatpush.msra.mxu0 %v27
  %2843 = vmatpush.msra.mxu0 %v26
  %2844 = vmatpush.msra.mxu0 %v25
  %2845 = vmatmul.f32.gmra.mxu0 %v2827
  %v2846 = vpop.f32.mrf.mxu0
  %v2847 = vadd.f32 0.0, %v2846
  %2848 = vdwg.mxu0
  %v2850 = vrot.slane %v2847, 1
  %v2851 = vrot.slane %v2847, 2
  %v2852 = vrot.slane %v2847, 3
  %v2853 = vrot.slane %v2847, 4
  %v2854 = vrot.slane %v2847, 5
  %v2855 = vrot.slane %v2847, 6
  %v2856 = vrot.slane %v2847, 7
  %v2865 = vadd.f32 %v89, %v2850
  %v2866 = vadd.f32 %v92, %v2851
  %v2867 = vadd.f32 %v95, %v2852
  %v2868 = vadd.f32 %v98, %v2853
  %v2869 = vadd.f32 %v101, %v2854
  %v2870 = vadd.f32 %v104, %v2855
  %v2871 = vadd.f32 %v107, %v2856
  %v2872 = vadd.f32 %v110, %v2847
  %v2873 = vxor.u32 %v2865, 2147483648
  %v2874 = vxor.u32 %v2866, 2147483648
  %v2875 = vxor.u32 %v2867, 2147483648
  %v2876 = vxor.u32 %v2868, 2147483648
  %v2877 = vxor.u32 %v2869, 2147483648
  %v2878 = vxor.u32 %v2870, 2147483648
  %v2879 = vxor.u32 %v2871, 2147483648
  %v2880 = vxor.u32 %v2872, 2147483648
  %v2881 = vmul.f32 %v2873, 1.442695
  %v2882 = vpow.pop %v2881
  %v2883 = vmul.f32 %v2874, 1.442695
  %v2884 = vpow.pop %v2883
  %v2885 = vmul.f32 %v2875, 1.442695
  %v2886 = vpow.pop %v2885
  %v2887 = vmul.f32 %v2876, 1.442695
  %v2888 = vpow.pop %v2887
  %v2889 = vmul.f32 %v2877, 1.442695
  %v2890 = vpow.pop %v2889
  %v2891 = vmul.f32 %v2878, 1.442695
  %v2892 = vpow.pop %v2891
  %v2893 = vmul.f32 %v2879, 1.442695
  %v2894 = vpow.pop %v2893
  %v2895 = vmul.f32 %v2880, 1.442695
  %v2896 = vpow.pop %v2895
  %v2897 = vadd.f32 %v2882, 1.0
  %v2898 = vadd.f32 %v2884, 1.0
  %v2899 = vadd.f32 %v2886, 1.0
  %v2900 = vadd.f32 %v2888, 1.0
  %v2901 = vadd.f32 %v2890, 1.0
  %v2902 = vadd.f32 %v2892, 1.0
  %v2903 = vadd.f32 %v2894, 1.0
  %v2904 = vadd.f32 %v2896, 1.0
  %v2905 = vrcp.pop %v2897
  %v2906 = vmul.f32 %v2897, %v2905
  %v2907 = vsub.f32 1.0, %v2906
  %v2908 = vmul.f32 %v2905, %v2907
  %v2909 = vadd.f32 %v2905, %v2908
  %vm2910 = vweird.f32 %v2897
  %vm2911 = vweird.f32 %v2905
  %vm2912 = vmor %vm2910, %vm2911
  %v2913 = vsel %vm2912, %v2905, %v2909
  %v2914 = vand.u32 2147483647, %v2897
  %vm2915 = vcmp.eq.f32.partialorder %v2914, 8.507059e+37
  %v2916 = vand.u32 %v2897, 2147483648
  %v2917 = vor.u32 1.1754944e-38, %v2916
  %v2918 = vsel %vm2915, %v2917, %v2913
  %v2919 = vmul.f32 1.0, %v2918
  %v2920 = vrcp.pop %v2898
  %v2921 = vmul.f32 %v2898, %v2920
  %v2922 = vsub.f32 1.0, %v2921
  %v2923 = vmul.f32 %v2920, %v2922
  %v2924 = vadd.f32 %v2920, %v2923
  %vm2925 = vweird.f32 %v2898
  %vm2926 = vweird.f32 %v2920
  %vm2927 = vmor %vm2925, %vm2926
  %v2928 = vsel %vm2927, %v2920, %v2924
  %v2929 = vand.u32 2147483647, %v2898
  %vm2930 = vcmp.eq.f32.partialorder %v2929, 8.507059e+37
  %v2931 = vand.u32 %v2898, 2147483648
  %v2932 = vor.u32 1.1754944e-38, %v2931
  %v2933 = vsel %vm2930, %v2932, %v2928
  %v2934 = vmul.f32 1.0, %v2933
  %v2935 = vrcp.pop %v2899
  %v2936 = vmul.f32 %v2899, %v2935
  %v2937 = vsub.f32 1.0, %v2936
  %v2938 = vmul.f32 %v2935, %v2937
  %v2939 = vadd.f32 %v2935, %v2938
  %vm2940 = vweird.f32 %v2899
  %vm2941 = vweird.f32 %v2935
  %vm2942 = vmor %vm2940, %vm2941
  %v2943 = vsel %vm2942, %v2935, %v2939
  %v2944 = vand.u32 2147483647, %v2899
  %vm2945 = vcmp.eq.f32.partialorder %v2944, 8.507059e+37
  %v2946 = vand.u32 %v2899, 2147483648
  %v2947 = vor.u32 1.1754944e-38, %v2946
  %v2948 = vsel %vm2945, %v2947, %v2943
  %v2949 = vmul.f32 1.0, %v2948
  %v2950 = vrcp.pop %v2900
  %v2951 = vmul.f32 %v2900, %v2950
  %v2952 = vsub.f32 1.0, %v2951
  %v2953 = vmul.f32 %v2950, %v2952
  %v2954 = vadd.f32 %v2950, %v2953
  %vm2955 = vweird.f32 %v2900
  %vm2956 = vweird.f32 %v2950
  %vm2957 = vmor %vm2955, %vm2956
  %v2958 = vsel %vm2957, %v2950, %v2954
  %v2959 = vand.u32 2147483647, %v2900
  %vm2960 = vcmp.eq.f32.partialorder %v2959, 8.507059e+37
  %v2961 = vand.u32 %v2900, 2147483648
  %v2962 = vor.u32 1.1754944e-38, %v2961
  %v2963 = vsel %vm2960, %v2962, %v2958
  %v2964 = vmul.f32 1.0, %v2963
  %v2965 = vrcp.pop %v2901
  %v2966 = vmul.f32 %v2901, %v2965
  %v2967 = vsub.f32 1.0, %v2966
  %v2968 = vmul.f32 %v2965, %v2967
  %v2969 = vadd.f32 %v2965, %v2968
  %vm2970 = vweird.f32 %v2901
  %vm2971 = vweird.f32 %v2965
  %vm2972 = vmor %vm2970, %vm2971
  %v2973 = vsel %vm2972, %v2965, %v2969
  %v2974 = vand.u32 2147483647, %v2901
  %vm2975 = vcmp.eq.f32.partialorder %v2974, 8.507059e+37
  %v2976 = vand.u32 %v2901, 2147483648
  %v2977 = vor.u32 1.1754944e-38, %v2976
  %v2978 = vsel %vm2975, %v2977, %v2973
  %v2979 = vmul.f32 1.0, %v2978
  %v2980 = vrcp.pop %v2902
  %v2981 = vmul.f32 %v2902, %v2980
  %v2982 = vsub.f32 1.0, %v2981
  %v2983 = vmul.f32 %v2980, %v2982
  %v2984 = vadd.f32 %v2980, %v2983
  %vm2985 = vweird.f32 %v2902
  %vm2986 = vweird.f32 %v2980
  %vm2987 = vmor %vm2985, %vm2986
  %v2988 = vsel %vm2987, %v2980, %v2984
  %v2989 = vand.u32 2147483647, %v2902
  %vm2990 = vcmp.eq.f32.partialorder %v2989, 8.507059e+37
  %v2991 = vand.u32 %v2902, 2147483648
  %v2992 = vor.u32 1.1754944e-38, %v2991
  %v2993 = vsel %vm2990, %v2992, %v2988
  %v2994 = vmul.f32 1.0, %v2993
  %v2995 = vrcp.pop %v2903
  %v2996 = vmul.f32 %v2903, %v2995
  %v2997 = vsub.f32 1.0, %v2996
  %v2998 = vmul.f32 %v2995, %v2997
  %v2999 = vadd.f32 %v2995, %v2998
  %vm3000 = vweird.f32 %v2903
  %vm3001 = vweird.f32 %v2995
  %vm3002 = vmor %vm3000, %vm3001
  %v3003 = vsel %vm3002, %v2995, %v2999
  %v3004 = vand.u32 2147483647, %v2903
  %vm3005 = vcmp.eq.f32.partialorder %v3004, 8.507059e+37
  %v3006 = vand.u32 %v2903, 2147483648
  %v3007 = vor.u32 1.1754944e-38, %v3006
  %v3008 = vsel %vm3005, %v3007, %v3003
  %v3009 = vmul.f32 1.0, %v3008
  %v3010 = vrcp.pop %v2904
  %v3011 = vmul.f32 %v2904, %v3010
  %v3012 = vsub.f32 1.0, %v3011
  %v3013 = vmul.f32 %v3010, %v3012
  %v3014 = vadd.f32 %v3010, %v3013
  %vm3015 = vweird.f32 %v2904
  %vm3016 = vweird.f32 %v3010
  %vm3017 = vmor %vm3015, %vm3016
  %v3018 = vsel %vm3017, %v3010, %v3014
  %v3019 = vand.u32 2147483647, %v2904
  %vm3020 = vcmp.eq.f32.partialorder %v3019, 8.507059e+37
  %v3021 = vand.u32 %v2904, 2147483648
  %v3022 = vor.u32 1.1754944e-38, %v3021
  %v3023 = vsel %vm3020, %v3022, %v3018
  %v3024 = vmul.f32 1.0, %v3023
  %v3025 = vtanh.pop %v2865
  %v3026 = vtanh.pop %v2866
  %v3027 = vtanh.pop %v2867
  %v3028 = vtanh.pop %v2868
  %v3029 = vtanh.pop %v2869
  %v3030 = vtanh.pop %v2870
  %v3031 = vtanh.pop %v2871
  %v3032 = vtanh.pop %v2872
  %v3041 = vrot.slane %v2747, 7
  %v3042 = vrot.slane %v2748, 7
  %v3043 = vrot.slane %v2749, 7
  %v3044 = vrot.slane %v2750, 7
  %v3045 = vrot.slane %v2751, 7
  %v3046 = vrot.slane %v2752, 7
  %v3047 = vrot.slane %v2753, 7
  %v3048 = vrot.slane %v2754, 7
  %v3057 = vmul.f32 %v2919, %v3041
  %v3058 = vmul.f32 %v2934, %v3042
  %v3059 = vmul.f32 %v2949, %v3043
  %v3060 = vmul.f32 %v2964, %v3044
  %v3061 = vmul.f32 %v2979, %v3045
  %v3062 = vmul.f32 %v2994, %v3046
  %v3063 = vmul.f32 %v3009, %v3047
  %v3064 = vmul.f32 %v3024, %v3048
  %3073 = vrot.lane.b32.xlu0 %v3025, 64
  %v3074 = vpop.permute.xlu0 %3073
  %3075 = vrot.lane.b32.xlu0 %v3026, 64
  %v3076 = vpop.permute.xlu0 %3075
  %3077 = vrot.lane.b32.xlu0 %v3027, 64
  %v3078 = vpop.permute.xlu0 %3077
  %3079 = vrot.lane.b32.xlu0 %v3028, 64
  %v3080 = vpop.permute.xlu0 %3079
  %3081 = vrot.lane.b32.xlu0 %v3029, 64
  %v3082 = vpop.permute.xlu0 %3081
  %3083 = vrot.lane.b32.xlu0 %v3030, 64
  %v3084 = vpop.permute.xlu0 %3083
  %3085 = vrot.lane.b32.xlu0 %v3031, 64
  %v3086 = vpop.permute.xlu0 %3085
  %3087 = vrot.lane.b32.xlu0 %v3032, 64
  %v3088 = vpop.permute.xlu0 %3087
  %v3097 = vmul.f32 %v2919, %v3074
  %v3098 = vmul.f32 %v2934, %v3076
  %v3099 = vmul.f32 %v2949, %v3078
  %v3100 = vmul.f32 %v2964, %v3080
  %v3101 = vmul.f32 %v2979, %v3082
  %v3102 = vmul.f32 %v2994, %v3084
  %v3103 = vmul.f32 %v3009, %v3086
  %v3104 = vmul.f32 %v3024, %v3088
  %3113 = vrot.lane.b32.xlu0 %v3097, 32
  %v3114 = vpop.permute.xlu0 %3113
  %3115 = vrot.lane.b32.xlu0 %v3098, 32
  %v3116 = vpop.permute.xlu0 %3115
  %3117 = vrot.lane.b32.xlu0 %v3099, 32
  %v3118 = vpop.permute.xlu0 %3117
  %3119 = vrot.lane.b32.xlu0 %v3100, 32
  %v3120 = vpop.permute.xlu0 %3119
  %3121 = vrot.lane.b32.xlu0 %v3101, 32
  %v3122 = vpop.permute.xlu0 %3121
  %3123 = vrot.lane.b32.xlu0 %v3102, 32
  %v3124 = vpop.permute.xlu0 %3123
  %3125 = vrot.lane.b32.xlu0 %v3103, 32
  %v3126 = vpop.permute.xlu0 %3125
  %3127 = vrot.lane.b32.xlu0 %v3104, 32
  %v3128 = vpop.permute.xlu0 %3127
  %v3137 = vadd.f32 %v3057, %v3114
  %v3138 = vadd.f32 %v3058, %v3116
  %v3139 = vadd.f32 %v3059, %v3118
  %v3140 = vadd.f32 %v3060, %v3120
  %v3141 = vadd.f32 %v3061, %v3122
  %v3142 = vadd.f32 %v3062, %v3124
  %v3143 = vadd.f32 %v3063, %v3126
  %v3144 = vadd.f32 %v3064, %v3128
  %v3145 = vtanh.pop %v3137
  %v3146 = vtanh.pop %v3138
  %v3147 = vtanh.pop %v3139
  %v3148 = vtanh.pop %v3140
  %v3149 = vtanh.pop %v3141
  %v3150 = vtanh.pop %v3142
  %v3151 = vtanh.pop %v3143
  %v3152 = vtanh.pop %v3144
  %3161 = vrot.lane.b32.xlu0 %v3145, 64
  %v3162 = vpop.permute.xlu0 %3161
  %3163 = vrot.lane.b32.xlu0 %v3146, 64
  %v3164 = vpop.permute.xlu0 %3163
  %3165 = vrot.lane.b32.xlu0 %v3147, 64
  %v3166 = vpop.permute.xlu0 %3165
  %3167 = vrot.lane.b32.xlu0 %v3148, 64
  %v3168 = vpop.permute.xlu0 %3167
  %3169 = vrot.lane.b32.xlu0 %v3149, 64
  %v3170 = vpop.permute.xlu0 %3169
  %3171 = vrot.lane.b32.xlu0 %v3150, 64
  %v3172 = vpop.permute.xlu0 %3171
  %3173 = vrot.lane.b32.xlu0 %v3151, 64
  %v3174 = vpop.permute.xlu0 %3173
  %3175 = vrot.lane.b32.xlu0 %v3152, 64
  %v3176 = vpop.permute.xlu0 %3175
  %v3185 = vmul.f32 %v2919, %v3162
  %v3186 = vmul.f32 %v2934, %v3164
  %v3187 = vmul.f32 %v2949, %v3166
  %v3188 = vmul.f32 %v2964, %v3168
  %v3189 = vmul.f32 %v2979, %v3170
  %v3190 = vmul.f32 %v2994, %v3172
  %v3191 = vmul.f32 %v3009, %v3174
  %v3192 = vmul.f32 %v3024, %v3176
  %v3193 = vld [vmem:[%s4] sm:$0x1]
  %v3195 = vperm.slane %v3193, 0
  %3196 = vrot.lane.b32.xlu0 %v3195, 96
  %v3197 = vpop.permute.xlu0 %3196
  %v3199 = vmul.f32 %v3185, %v3197
  %v3200 = vmul.f32 %v3186, %v3197
  %v3201 = vmul.f32 %v3187, %v3197
  %v3202 = vmul.f32 %v3188, %v3197
  %v3203 = vmul.f32 %v3189, %v3197
  %v3204 = vmul.f32 %v3190, %v3197
  %v3205 = vmul.f32 %v3191, %v3197
  %v3206 = vmul.f32 %v3192, %v3197
  %v3215 = vrot.slane %v3200, 7
  %v3216 = vrot.slane %v3201, 6
  %v3217 = vsel %vm465, %v3216, %v3215
  %v3218 = vrot.slane %v3202, 5
  %v3219 = vsel %vm468, %v3218, %v3217
  %v3220 = vrot.slane %v3203, 4
  %v3221 = vsel %vm471, %v3220, %v3219
  %v3222 = vrot.slane %v3204, 3
  %v3223 = vsel %vm474, %v3222, %v3221
  %v3224 = vrot.slane %v3205, 2
  %v3225 = vsel %vm477, %v3224, %v3223
  %v3226 = vrot.slane %v3206, 1
  %v3227 = vsel %vm480, %v3226, %v3225
  %3228 = vrot.lane.b32.xlu0 %v3199, 32
  %v3229 = vpop.permute.xlu0 %3228
  %3230 = vrot.lane.b32.xlu0 %v3227, 32
  %v3231 = vpop.permute.xlu0 %3230
  %vm3234 = vcmask 261127
  %v3235 = vsel %vm3234, %v3229, 0.0
  %3236 = vadd.xlane.f32.xlu0 %v3235
  %v3237 = vpop.xlane.xlu0 %3236
  %vm3238 = vcmask 260096
  %v3239 = vsel %vm3238, %v3231, 0.0
  %3240 = vadd.xlane.f32.xlu0 %v3239
  %v3241 = vpop.xlane.xlu0 %3240
  %v3242 = vld [vmem:[#allocation2] sm:$0x1]
  %v3244 = vperm.slane %v3242, 0
  %v3246 = vadd.f32 %v3237, %v3244
  %v3247 = vadd.f32 %v3241, %v3244
  %vm3248 = vcmask 7175
  %3249 = vst.msk [vmem:[%s6 - $0x7] sm:$0x80] %vm3248, %v3246
  %vm3250 = vcmask 6144
  %3251 = vst.msk [vmem:[%s6 + $0x1] sm:$0x7f] %vm3250, %v3247
  // Predicated region
  $region26: #{model_forward.1} parent=0 // pred_check
    _
  $region27: #{model_forward.1} parent=0 // pred_check_branch
    %3253 = sbr.rel (0) target = $region29
  $region28: #{model_forward.1} parent=0 // pred_region
    _
  $region29: #{model_forward.1} parent=0 // pred_fallthru
    _
  // Predicated region
  $region30: #{model_forward.1} parent=0 // pred_check
    _
  $region31: #{model_forward.1} parent=0 // pred_check_branch
    %3255 = sbr.rel (0) target = $region33
  $region32: #{model_forward.1} parent=0 // pred_region
    _
  $region33: #{model_forward.1} parent=0 // pred_fallthru
    _

</llo_original>
